<compile_context>
chip_gen: v7x
topology: tpu7x:2x2x1
jax: 0.10.0
libtpu: 0.0.40
codegen_flags: <defaults>
</compile_context>

<pallas_src>
import functools
import math

import jax
import jax.numpy as jnp
import numpy as np
from jax.experimental import pallas as pl
from jax.experimental.pallas import tpu as pltpu


# --------------------------------------------------------------------------- helpers
def _round_up(a, b):
    return (a + b - 1) // b * b


def _cdiv(a, b):
    return (a + b - 1) // b


def _largest_tile(dim_pad, cap, unit=128):
    """Largest multiple of `unit` that divides dim_pad and is <= cap (dim_pad % unit == 0)."""
    t = max(unit, min(cap, dim_pad) // unit * unit)
    while dim_pad % t:
        t -= unit
    return t


def _fold_bn(gamma, beta, mean, var, eps):
    inv_std = 1.0 / jnp.sqrt(var.astype(jnp.float32) + eps)
    scale = gamma.astype(jnp.float32) * inv_std
    bias = beta.astype(jnp.float32) - mean.astype(jnp.float32) * scale
    return scale, bias


# ------------------------------------------------------------------ kernel 1: tiled GEMM
def _matmul_bn_act_kernel(p_ref, w_ref, bias_ref, o_ref, acc_ref, *, act):
    # p_ref: (tm, tk) bf16 patches   w_ref: (tk, tn) bf16 (BN scale folded)
    # bias_ref: (1, tn) f32          o_ref: (tm, tn)      acc_ref: (tm, tn) f32
    @pl.when(pl.program_id(2) == 0)
    def _():
        acc_ref[...] = jnp.zeros_like(acc_ref)

    acc_ref[...] += jnp.dot(p_ref[...], w_ref[...],
                            preferred_element_type=jnp.float32)

    @pl.when(pl.program_id(2) == pl.num_programs(2) - 1)
    def _():
        y = acc_ref[...] + bias_ref[...]
        if act:
            y = jnp.where(y > 0, y, 0.1 * y)  # LeakyReLU(0.1)
        o_ref[...] = y.astype(o_ref.dtype)


def _gemm_bn_act(patches, w_mat, bias, out_dtype, *, act, tm_cap, tn_cap, tk_cap):
    """patches: (M, K) bf16;  w_mat: (K, C2) f32 (scale folded);  bias: (C2,) f32."""
    M, Kdim = patches.shape
    C2 = w_mat.shape[1]

    C2_pad = _round_up(C2, 128)
    tn = _largest_tile(C2_pad, tn_cap)

    if Kdim <= tk_cap:                      # single full-width K tile, no 128-padding
        K_pad = _round_up(Kdim, 16)
        tk = K_pad
    else:                                   # tile K with a divisor of the 128-rounded dim
        K_pad = _round_up(Kdim, 128)
        tk = _largest_tile(K_pad, tk_cap)

    tm = min(tm_cap, _round_up(M, 8))
    # keep >= 2 (ideally >= 4) parallel output tiles so both v7x TensorCores get work
    while tm > 256 and _cdiv(M, tm) * (C2_pad // tn) < 4:
        tm = max(256, _round_up(tm // 2, 8))
    while tm > 128 and _cdiv(M, tm) * (C2_pad // tn) < 2:
        tm = max(128, _round_up(tm // 2, 8))
    M_pad = _round_up(M, tm)

    patches = jnp.pad(patches, ((0, M_pad - M), (0, K_pad - Kdim)))
    w_mat = jnp.pad(w_mat, ((0, K_pad - Kdim), (0, C2_pad - C2))).astype(jnp.bfloat16)
    bias_row = jnp.pad(bias, (0, C2_pad - C2)).reshape(1, C2_pad)

    out_bytes = np.dtype(out_dtype).itemsize
    vmem_est = (2 * tm * tk * 2 + 2 * tk * tn * 2 + 2 * tm * tn * out_bytes
                + tm * tn * 4 + 2 * tn * 4)
    vmem_limit = int(min(max(2 * vmem_est, 24 << 20), 64 << 20))

    grid = (M_pad // tm, C2_pad // tn, K_pad // tk)
    flops = 2 * M_pad * K_pad * C2_pad
    bytes_accessed = (M_pad * K_pad * 2 * (C2_pad // tn)
                      + K_pad * C2_pad * 2 * (M_pad // tm)
                      + M_pad * C2_pad * out_bytes)

    kern = functools.partial(_matmul_bn_act_kernel, act=act)
    out = pl.pallas_call(
        kern,
        out_shape=jax.ShapeDtypeStruct((M_pad, C2_pad), out_dtype),
        grid_spec=pltpu.PrefetchScalarGridSpec(
            num_scalar_prefetch=0,
            grid=grid,
            in_specs=[
                pl.BlockSpec((tm, tk), lambda i, j, l: (i, l)),   # patches
                pl.BlockSpec((tk, tn), lambda i, j, l: (l, j)),   # weight
                pl.BlockSpec((1, tn), lambda i, j, l: (0, j)),    # bias
            ],
            out_specs=pl.BlockSpec((tm, tn), lambda i, j, l: (i, j)),
            scratch_shapes=[pltpu.VMEM((tm, tn), jnp.float32)],
        ),
        compiler_params=pltpu.CompilerParams(
            dimension_semantics=("parallel", "parallel", "arbitrary"),
            vmem_limit_bytes=vmem_limit),
        cost_estimate=pl.CostEstimate(flops=flops, transcendentals=0,
                                      bytes_accessed=bytes_accessed),
    )(patches, w_mat, bias_row)
    return out[:M, :C2]


# ----------------------------------------------------- kernel 2: fused stride-1 kxk conv
def _fused_conv_kernel(a_ref, b_ref, w_ref, bias_ref, o_ref, acc_ref,
                       *, k, off_step, act):
    # a_ref:    (1, tm_rows, Kc) bf16  current row block of the kw-unfolded input
    # b_ref:    (1, hb_rows, Kc) bf16  halo rows just below the row block
    # w_ref:    (k, Kc, tn)      bf16  per-kh weight matrices (BN scale folded in)
    # bias_ref: (1, tn)          f32   folded BN bias
    # o_ref:    (1, tm_rows, tn)       acc_ref: (tm_rows, tn) f32
    tm_rows = a_ref.shape[1]
    a = a_ref[0]
    acc_ref[...] = jnp.dot(a, w_ref[0], preferred_element_type=jnp.float32)
    for kh in range(1, k):                               # static unroll over kh taps
        off = kh * off_step
        if off == tm_rows:
            win = b_ref[0]
        else:
            win = jnp.concatenate([a[off:, :], b_ref[0, :off, :]], axis=0)
        acc_ref[...] += jnp.dot(win, w_ref[kh], preferred_element_type=jnp.float32)
    y = acc_ref[...] + bias_ref[...]
    if act:
        y = jnp.where(y > 0, y, 0.1 * y)                 # LeakyReLU(0.1)
    o_ref[0] = y.astype(o_ref.dtype)


def _fused_conv_bn_act(xn, weight, scale, bias, out_dtype, *, act, k, p, d, OH, OW,
                       tn_cap, target_rows):
    """k > 1, stride-1 conv+BN+act.  xn: [N,H,W,C1] bf16 (NHWC, unpadded)."""
    N, H, W, C1 = xn.shape
    C2 = weight.shape[0]
    Kc = k * C1
    hd = (k - 1) * d                          # halo rows needed below each row block

    C2_pad = _round_up(C2, 128)
    tn = _largest_tile(C2_pad, tn_cap)

    OW8 = _round_up(OW, 8)
    min_th = 8 * hd // math.gcd(8, hd)        # multiple of 8 and of hd
    th = max(min_th, (target_rows // OW8) // min_th * min_th)
    th = min(th, _round_up(OH, min_th))
    if th * OW8 > 4096:                       # keep the row block VMEM-friendly
        th = max(min_th, (4096 // OW8) // min_th * min_th)
    # give v7x's two TensorCores at least 2 parallel tiles when the layer is small
    while th > min_th and N * (C2_pad // tn) * _cdiv(OH, th) < 2:
        th = max(min_th, (th // 2) // min_th * min_th)

    OH_pad = _round_up(OH, th)
    nbh = OH_pad // th
    tm_rows = th * OW8                        # matmul rows per grid step
    hb_rows = hd * OW8                        # halo rows per grid step
    blk_i = th // hd                          # halo block-index stride (hd | th)

    # ---- host glue: NHWC pad + kw-unfold (k x the input bytes, not k^2 x) -------
    Hrows = OH_pad + hd
    extra_h = Hrows - (H + 2 * p)             # >= 0
    extra_w = OW8 - OW
    xp = jnp.pad(xn, ((0, 0), (p, p + extra_h), (p, p + extra_w), (0, 0)))
    cols = [xp[:, :, kw * d: kw * d + OW8, :] for kw in range(k)]
    u2 = jnp.concatenate(cols, axis=-1).reshape(N, Hrows * OW8, Kc)    # bf16

    # ---- weights: BN scale folded, one (Kc x C2) matrix per kh -------------------
    w_f = weight.astype(jnp.float32) * scale[:, None, None, None]      # [C2,C1,k,k]
    w_f = jnp.transpose(w_f, (2, 3, 1, 0)).reshape(k, Kc, C2)           # [kh, kw*C1+c, C2]
    w_b = jnp.pad(w_f, ((0, 0), (0, 0), (0, C2_pad - C2))).astype(jnp.bfloat16)
    bias_row = jnp.pad(bias, (0, C2_pad - C2)).reshape(1, C2_pad)

    out_bytes = np.dtype(out_dtype).itemsize
    vmem_est = (2 * tm_rows * Kc * 2 + 2 * hb_rows * Kc * 2       # row + halo blocks
                + 2 * k * Kc * tn * 2                             # weight slab
                + 2 * tm_rows * tn * out_bytes                    # output tile
                + tm_rows * tn * 4                                # f32 accumulator
                + 2 * tm_rows * Kc * 2 + 2 * tn * 4)              # concat temps, bias
    vmem_limit = int(min(max(2 * vmem_est, 24 << 20), 64 << 20))

    n_c2 = C2_pad // tn
    grid = (N, n_c2, nbh)                     # row blocks innermost: weight slab stays resident
    flops = 2 * N * OH_pad * OW8 * k * Kc * C2_pad
    bytes_accessed = (N * OH_pad * OW8 * Kc * 2 * n_c2
                      + N * nbh * hb_rows * Kc * 2 * n_c2
                      + N * k * Kc * C2_pad * 2
                      + N * OH_pad * OW8 * C2_pad * out_bytes)

    kern = functools.partial(_fused_conv_kernel, k=k, off_step=d * OW8, act=act)
    out = pl.pallas_call(
        kern,
        out_shape=jax.ShapeDtypeStruct((N, OH_pad * OW8, C2_pad), out_dtype),
        grid_spec=pltpu.PrefetchScalarGridSpec(
            num_scalar_prefetch=0,
            grid=grid,
            in_specs=[
                pl.BlockSpec((1, tm_rows, Kc), lambda n, j, i: (n, i, 0)),
                pl.BlockSpec((1, hb_rows, Kc),
                             lambda n, j, i: (n, (i + 1) * blk_i, 0)),
                pl.BlockSpec((k, Kc, tn), lambda n, j, i: (0, 0, j)),
                pl.BlockSpec((1, tn), lambda n, j, i: (0, j)),
            ],
            out_specs=pl.BlockSpec((1, tm_rows, tn), lambda n, j, i: (n, i, j)),
            scratch_shapes=[pltpu.VMEM((tm_rows, tn), jnp.float32)],
        ),
        compiler_params=pltpu.CompilerParams(
            dimension_semantics=("parallel", "parallel", "parallel"),
            vmem_limit_bytes=vmem_limit),
        cost_estimate=pl.CostEstimate(flops=flops, transcendentals=0,
                                      bytes_accessed=bytes_accessed),
    )(u2, u2, w_b, bias_row)

    out = out.reshape(N, OH_pad, OW8, C2_pad)[:, :OH, :OW, :C2]
    return out                                 # NHWC


# ------------------------------------------------------------ im2col fallback (k>1, s>1)
def _im2col(xn, *, k, s, p, d, OH, OW):
    N = xn.shape[0]
    C1 = xn.shape[3]
    xp = jnp.pad(xn, ((0, 0), (p, p), (p, p), (0, 0)))
    cols = []
    for kh in range(k):
        for kw in range(k):
            h0, w0 = kh * d, kw * d
            cols.append(xp[:, h0:h0 + (OH - 1) * s + 1:s,
                           w0:w0 + (OW - 1) * s + 1:s, :])
    pat = jnp.concatenate(cols, axis=-1)       # [N, OH, OW, k*k*C1], K order = (kh,kw,c)
    return pat.reshape(N * OH * OW, k * k * C1)


# ------------------------------------------------------------------------ module forward
def conv_forward(x, weight, gamma, beta, running_mean, running_var,
                 *, k, s=1, p=0, d=1, g=1, act=True, eps=1e-5,
                 out_dtype=None, out_layout="NCHW",
                 tm=512, tn=512, tk=512):
    """Forward of CSPDarknet `Conv` (Conv2d bias=False -> BatchNorm2d -> LeakyReLU(0.1)).

    x: [N,C1,H,W] (NCHW), weight: [C2,C1,k,k].  Returns [N,C2,OH,OW] (or NHWC if
    out_layout == "NHWC").  Pass out_dtype=jnp.bfloat16 / out_layout="NHWC" when
    chaining Conv layers to halve the output write and skip the layout transpose.
    tm/tn/tk are tile-size caps; actual tiles divide the (128-rounded) problem dims.
    """
    assert g == 1, "only groups=1 implemented"  # TODO(synk): grouped conv not implemented
    assert out_layout in ("NCHW", "NHWC")

    N, C1, H, W = x.shape
    C2 = weight.shape[0]
    OH = (H + 2 * p - d * (k - 1) - 1) // s + 1
    OW = (W + 2 * p - d * (k - 1) - 1) // s + 1
    if out_dtype is None:
        out_dtype = x.dtype

    scale, bias = _fold_bn(gamma, beta, running_mean, running_var, eps)

    xb = x.astype(jnp.bfloat16)
    xn = jnp.transpose(xb, (0, 2, 3, 1))        # NHWC

    if k == 1:
        # 1x1 conv: no im2col -- patches are just an (optionally strided) NHWC view.
        xp = jnp.pad(xn, ((0, 0), (p, p), (p, p), (0, 0))) if p else xn
        patches = xp[:, ::s, ::s, :][:, :OH, :OW, :].reshape(N * OH * OW, C1)
        w_mat = weight.astype(jnp.float32).reshape(C2, C1).T * scale[None, :]
        out2d = _gemm_bn_act(patches, w_mat, bias, out_dtype, act=act,
                             tm_cap=tm, tn_cap=tn, tk_cap=tk)
        out = out2d.reshape(N, OH, OW, C2)
    elif s == 1:
        out = _fused_conv_bn_act(xn, weight, scale, bias, out_dtype, act=act,
                                 k=k, p=p, d=d, OH=OH, OW=OW,
                                 tn_cap=tn, target_rows=tm)
    else:
        # TODO(synk): fused path covers stride 1 only; strided k>1 convs (the few
        # CSPDarknet downsample layers) still use a materialized im2col.
        patches = _im2col(xn, k=k, s=s, p=p, d=d, OH=OH, OW=OW)
        w_mat = (jnp.transpose(weight.astype(jnp.float32), (2, 3, 1, 0))
                 .reshape(k * k * C1, C2) * scale[None, :])
        out2d = _gemm_bn_act(patches, w_mat, bias, out_dtype, act=act,
                             tm_cap=tm, tn_cap=tn, tk_cap=tk)
        out = out2d.reshape(N, OH, OW, C2)

    if out_layout == "NCHW":
        out = jnp.transpose(out, (0, 3, 1, 2))
    return out


# ----------------------------------------------------------------------------- reference
def _reference(x, weight, gamma, beta, mean, var, *, k, s, p, d, act, eps=1e-5):
    # Mirrors the kernel's quantization: BN scale folded into the weight before the
    # bf16 cast, bf16 inputs, f32 accumulation.
    inv_std = 1.0 / jnp.sqrt(var.astype(jnp.float32) + eps)
    scale = gamma.astype(jnp.float32) * inv_std
    bias = beta.astype(jnp.float32) - mean.astype(jnp.float32) * scale
    wq = (weight.astype(jnp.float32) * scale[:, None, None, None]
          ).astype(jnp.bfloat16).astype(jnp.float32)
    xq = x.astype(jnp.bfloat16).astype(jnp.float32)
    y = jax.lax.conv_general_dilated(
        xq, wq, window_strides=(s, s), padding=[(p, p), (p, p)],
        rhs_dilation=(d, d), dimension_numbers=("NCHW", "OIHW", "NCHW"))
    y = y + bias[None, :, None, None]
    if act:
        y = jnp.where(y > 0, y, 0.1 * y)
    return y


if __name__ == "__main__":
    key = jax.random.PRNGKey(0)
    k_x, k_w, k_g, k_b, k_m, k_v = jax.random.split(key, 6)

    N, C1, H, W = 2, 4, 16, 16
    C2 = 8

    x = jax.random.normal(k_x, (N, C1, H, W), dtype=jnp.float32)
    gamma = jax.random.normal(k_g, (C2,), dtype=jnp.float32) * 0.1 + 1.0
    beta = jax.random.normal(k_b, (C2,), dtype=jnp.float32) * 0.1
    rmean = jax.random.normal(k_m, (C2,), dtype=jnp.float32) * 0.1
    rvar = jax.nn.softplus(jax.random.normal(k_v, (C2,), dtype=jnp.float32)) + 0.5

    def check(out, ref, tol, name):
        out = jax.block_until_ready(out).astype(jnp.float32)
        assert out.shape == ref.shape, (name, out.shape, ref.shape)
        err = float(jnp.max(jnp.abs(out - ref)))
        assert jnp.allclose(out, ref, atol=tol, rtol=tol), (name, err)

    # 3x3 / s=1 / p=1  -> fused (kw-unfold + in-kernel kh loop) path
    w3 = jax.random.normal(k_w, (C2, C1, 3, 3), dtype=jnp.float32) * 0.1
    out = conv_forward(x, w3, gamma, beta, rmean, rvar, k=3, s=1, p=1, act=True)
    ref3 = _reference(x, w3, gamma, beta, rmean, rvar, k=3, s=1, p=1, d=1, act=True)
    check(out, ref3, 2e-2, "k3s1")

    # same layer with bf16 NHWC output (what a layer chain would use)
    out_nhwc = conv_forward(x, w3, gamma, beta, rmean, rvar, k=3, s=1, p=1, act=True,
                            out_dtype=jnp.bfloat16, out_layout="NHWC")
    check(out_nhwc, jnp.transpose(ref3, (0, 2, 3, 1)), 5e-2, "k3s1_bf16_nhwc")

    # 1x1 / s=1 -> no-im2col fast path
    w1 = jax.random.normal(k_w, (C2, C1, 1, 1), dtype=jnp.float32) * 0.1
    out = conv_forward(x, w1, gamma, beta, rmean, rvar, k=1, s=1, p=0, act=True)
    ref1 = _reference(x, w1, gamma, beta, rmean, rvar, k=1, s=1, p=0, d=1, act=True)
    check(out, ref1, 2e-2, "k1s1")

    # 3x3 / s=2 (downsample), act=False -> im2col fallback path
    out = conv_forward(x, w3, gamma, beta, rmean, rvar, k=3, s=2, p=1, act=False)
    ref2 = _reference(x, w3, gamma, beta, rmean, rvar, k=3, s=2, p=1, d=1, act=False)
    check(out, ref2, 2e-2, "k3s2_noact")

    print("KERNEL_OK")
</pallas_src>

<mosaic_0001>
module attributes {stable_mosaic.version = 11 : i64} {
  func.func @_fused_conv_kernel(%arg0: i32, %arg1: i32, %arg2: i32, %arg3: memref<1x256x12xbf16, #tpu.memory_space<vmem>>, %arg4: memref<1x32x12xbf16, #tpu.memory_space<vmem>>, %arg5: memref<3x12x128xbf16, #tpu.memory_space<vmem>>, %arg6: memref<1x128xf32, #tpu.memory_space<vmem>>, %arg7: memref<1x256x128xf32, #tpu.memory_space<vmem>>, %arg8: memref<256x128xf32, #tpu.memory_space<vmem>>) attributes {dimension_semantics = [#tpu.dimension_semantics<parallel>, #tpu.dimension_semantics<parallel>, #tpu.dimension_semantics<parallel>], iteration_bounds = array<i64: 2, 1, 1>, scalar_prefetch = 0 : i64, scratch_operands = 1 : i64, tpu.core_type = #tpu.core_type<tc>, window_params = [{transform_indices = @transform_0, window_bounds = array<i64: 1, 256, 12>}, {transform_indices = @transform_1, window_bounds = array<i64: 1, 32, 12>}, {transform_indices = @transform_2, window_bounds = array<i64: 3, 12, 128>}, {transform_indices = @transform_3, window_bounds = array<i64: 1, 128>}, {transform_indices = @transform_4, window_bounds = array<i64: 1, 256, 128>}]} {
    %c0 = arith.constant 0 : index
    %c0_0 = arith.constant 0 : index
    %c0_1 = arith.constant 0 : index
    %0 = vector.load %arg3[%c0, %c0_0, %c0_1] : memref<1x256x12xbf16, #tpu.memory_space<vmem>>, vector<1x256x12xbf16>
    %1 = vector.shape_cast %0 : vector<1x256x12xbf16> to vector<256x12xbf16>
    %c0_2 = arith.constant 0 : index
    %c0_3 = arith.constant 0 : index
    %c0_4 = arith.constant 0 : index
    %2 = vector.load %arg5[%c0_2, %c0_3, %c0_4] : memref<3x12x128xbf16, #tpu.memory_space<vmem>>, vector<1x12x128xbf16>
    %3 = vector.shape_cast %2 : vector<1x12x128xbf16> to vector<12x128xbf16>
    %cst = arith.constant dense<0.000000e+00> : vector<256x128xf32>
    %4 = tpu.matmul %1, %3, %cst {dimension_numbers = #tpu.dot_dimension_numbers<[1], [0], [0], [1], [0, 0, 1, 1], [], []>} : vector<256x12xbf16>, vector<12x128xbf16>, vector<256x128xf32> -> vector<256x128xf32>
    %c0_5 = arith.constant 0 : index
    %c0_6 = arith.constant 0 : index
    %5 = vector.load %arg8[%c0_5, %c0_6] : memref<256x128xf32, #tpu.memory_space<vmem>>, vector<256x128xf32>
    tpu.vector_store %arg8[%c0_5, %c0_6], %4 {strides = array<i32>} : memref<256x128xf32, #tpu.memory_space<vmem>>, vector<256x128xf32>,
    %6 = vector.extract_strided_slice %1 {offsets = [16, 0], sizes = [240, 12], strides = [1, 1]} : vector<256x12xbf16> to vector<240x12xbf16>
    %c0_7 = arith.constant 0 : index
    %c0_8 = arith.constant 0 : index
    %c0_9 = arith.constant 0 : index
    %7 = vector.load %arg4[%c0_7, %c0_8, %c0_9] : memref<1x32x12xbf16, #tpu.memory_space<vmem>>, vector<1x16x12xbf16>
    %8 = vector.shape_cast %7 : vector<1x16x12xbf16> to vector<16x12xbf16>
    %9 = tpu.concatenate %6, %8 in 0 : vector<240x12xbf16>, vector<16x12xbf16> -> vector<256x12xbf16>
    %c0_10 = arith.constant 0 : index
    %c0_11 = arith.constant 0 : index
    %10 = vector.load %arg8[%c0_10, %c0_11] : memref<256x128xf32, #tpu.memory_space<vmem>>, vector<256x128xf32>
    %c1 = arith.constant 1 : index
    %c0_12 = arith.constant 0 : index
    %c0_13 = arith.constant 0 : index
    %11 = vector.load %arg5[%c1, %c0_12, %c0_13] : memref<3x12x128xbf16, #tpu.memory_space<vmem>>, vector<1x12x128xbf16>
    %12 = vector.shape_cast %11 : vector<1x12x128xbf16> to vector<12x128xbf16>
    %cst_14 = arith.constant dense<0.000000e+00> : vector<256x128xf32>
    %13 = tpu.matmul %9, %12, %cst_14 {dimension_numbers = #tpu.dot_dimension_numbers<[1], [0], [0], [1], [0, 0, 1, 1], [], []>} : vector<256x12xbf16>, vector<12x128xbf16>, vector<256x128xf32> -> vector<256x128xf32>
    %14 = arith.addf %10, %13 : vector<256x128xf32>
    %c0_15 = arith.constant 0 : index
    %c0_16 = arith.constant 0 : index
    %15 = vector.load %arg8[%c0_15, %c0_16] : memref<256x128xf32, #tpu.memory_space<vmem>>, vector<256x128xf32>
    tpu.vector_store %arg8[%c0_15, %c0_16], %14 {strides = array<i32>} : memref<256x128xf32, #tpu.memory_space<vmem>>, vector<256x128xf32>,
    %16 = vector.extract_strided_slice %1 {offsets = [32, 0], sizes = [224, 12], strides = [1, 1]} : vector<256x12xbf16> to vector<224x12xbf16>
    %c0_17 = arith.constant 0 : index
    %c0_18 = arith.constant 0 : index
    %c0_19 = arith.constant 0 : index
    %17 = vector.load %arg4[%c0_17, %c0_18, %c0_19] : memref<1x32x12xbf16, #tpu.memory_space<vmem>>, vector<1x32x12xbf16>
    %18 = vector.shape_cast %17 : vector<1x32x12xbf16> to vector<32x12xbf16>
    %19 = tpu.concatenate %16, %18 in 0 : vector<224x12xbf16>, vector<32x12xbf16> -> vector<256x12xbf16>
    %c0_20 = arith.constant 0 : index
    %c0_21 = arith.constant 0 : index
    %20 = vector.load %arg8[%c0_20, %c0_21] : memref<256x128xf32, #tpu.memory_space<vmem>>, vector<256x128xf32>
    %c2 = arith.constant 2 : index
    %c0_22 = arith.constant 0 : index
    %c0_23 = arith.constant 0 : index
    %21 = vector.load %arg5[%c2, %c0_22, %c0_23] : memref<3x12x128xbf16, #tpu.memory_space<vmem>>, vector<1x12x128xbf16>
    %22 = vector.shape_cast %21 : vector<1x12x128xbf16> to vector<12x128xbf16>
    %cst_24 = arith.constant dense<0.000000e+00> : vector<256x128xf32>
    %23 = tpu.matmul %19, %22, %cst_24 {dimension_numbers = #tpu.dot_dimension_numbers<[1], [0], [0], [1], [0, 0, 1, 1], [], []>} : vector<256x12xbf16>, vector<12x128xbf16>, vector<256x128xf32> -> vector<256x128xf32>
    %24 = arith.addf %20, %23 : vector<256x128xf32>
    %c0_25 = arith.constant 0 : index
    %c0_26 = arith.constant 0 : index
    %25 = vector.load %arg8[%c0_25, %c0_26] : memref<256x128xf32, #tpu.memory_space<vmem>>, vector<256x128xf32>
    tpu.vector_store %arg8[%c0_25, %c0_26], %24 {strides = array<i32>} : memref<256x128xf32, #tpu.memory_space<vmem>>, vector<256x128xf32>,
    %c0_27 = arith.constant 0 : index
    %c0_28 = arith.constant 0 : index
    %26 = vector.load %arg8[%c0_27, %c0_28] : memref<256x128xf32, #tpu.memory_space<vmem>>, vector<256x128xf32>
    %c0_29 = arith.constant 0 : index
    %c0_30 = arith.constant 0 : index
    %27 = vector.load %arg6[%c0_29, %c0_30] : memref<1x128xf32, #tpu.memory_space<vmem>>, vector<1x128xf32>
    %28 = vector.broadcast %27 : vector<1x128xf32> to vector<256x128xf32>
    %29 = arith.addf %26, %28 : vector<256x128xf32>
    %cst_31 = arith.constant 0.000000e+00 : f32
    %30 = vector.broadcast %cst_31 : f32 to vector<256x128xf32>
    %31 = arith.cmpf ogt, %29, %30 : vector<256x128xf32>
    %cst_32 = arith.constant 1.000000e-01 : f32
    %32 = vector.broadcast %cst_32 : f32 to vector<256x128xf32>
    %33 = arith.mulf %32, %29 : vector<256x128xf32>
    %34 = arith.select %31, %29, %33 : vector<256x128xi1>, vector<256x128xf32>
    %c0_33 = arith.constant 0 : index
    %c0_34 = arith.constant 0 : index
    %c0_35 = arith.constant 0 : index
    %35 = vector.load %arg7[%c0_33, %c0_34, %c0_35] : memref<1x256x128xf32, #tpu.memory_space<vmem>>, vector<1x256x128xf32>
    %36 = vector.shape_cast %35 : vector<1x256x128xf32> to vector<256x128xf32>
    %37 = vector.shape_cast %34 : vector<256x128xf32> to vector<1x256x128xf32>
    tpu.vector_store %arg7[%c0_33, %c0_34, %c0_35], %37 {strides = array<i32>} : memref<1x256x128xf32, #tpu.memory_space<vmem>>, vector<1x256x128xf32>,
    return
  }
  func.func @transform_0(%arg0: i32, %arg1: i32, %arg2: i32) -> (i32, i32, i32) {
    %c0_i32 = arith.constant 0 : i32
    %c0_i32_0 = arith.constant 0 : i32
    return %arg0, %arg2, %c0_i32 : i32, i32, i32
  }
  func.func @transform_1(%arg0: i32, %arg1: i32, %arg2: i32) -> (i32, i32, i32) {
    %c1_i32 = arith.constant 1 : i32
    %0 = arith.addi %arg2, %c1_i32 : i32
    %c8_i32 = arith.constant 8 : i32
    %1 = arith.muli %0, %c8_i32 : i32
    %c0_i32 = arith.constant 0 : i32
    %c0_i32_0 = arith.constant 0 : i32
    return %arg0, %1, %c0_i32 : i32, i32, i32
  }
  func.func @transform_2(%arg0: i32, %arg1: i32, %arg2: i32) -> (i32, i32, i32) {
    %c0_i32 = arith.constant 0 : i32
    %c0_i32_0 = arith.constant 0 : i32
    %c0_i32_1 = arith.constant 0 : i32
    return %c0_i32, %c0_i32_0, %arg1 : i32, i32, i32
  }
  func.func @transform_3(%arg0: i32, %arg1: i32, %arg2: i32) -> (i32, i32) {
    %c0_i32 = arith.constant 0 : i32
    %c0_i32_0 = arith.constant 0 : i32
    return %c0_i32, %arg1 : i32, i32
  }
  func.func @transform_4(%arg0: i32, %arg1: i32, %arg2: i32) -> (i32, i32, i32) {
    %c0_i32 = arith.constant 0 : i32
    return %arg0, %arg2, %arg1 : i32, i32, i32
  }
}

</mosaic_0001>

<llo_original>
// kernel: tpu_custom_call.1
$region0: #{tpu_custom_call.1}
  #allocation0 [shape = 'u32[]', space=smem, size = 0x4, offset = 0x4, fixed_abs, tag = 'smem constant byte address 0x4 - core index']
  #allocation1 [shape = 'u32[144,128]{1,0:T(1,128)}', space=vmem, size = 0x12000, scoped, tag = 'internal scratch']
  #allocation2 [shape = 'f32[256,128]{1,0:T(8,128)}', space=vmem, size = 0x20000, scoped, tag = 'scratch operand']
  %s0 = inlined_call_operand.vmem [shape: bf16[2,288,12], index: 0, kind: input, shape index: {}]
  %s1 = inlined_call_operand.vmem [shape: bf16[2,288,12], index: 1, kind: input, shape index: {}]
  %s2 = inlined_call_operand.vmem [shape: bf16[3,12,128], index: 2, kind: input, shape index: {}]
  %s3 = inlined_call_operand.vmem [shape: f32[1,128], index: 3, kind: input, shape index: {}]
  %s4 = inlined_call_operand.hbm [shape: f32[2,256,128], index: 4, kind: output, shape index: {}]
  %s5 = sld [smem:[#allocation0]]
  $region49: #{tpu_custom_call.1} parent=0
    _
  %s7 = ssub.s32 1, %s5
  %s8 = scalar_select 0, %s7, %s5
  $region1: #{tpu_custom_call.1} parent=0
    #allocation3 [shape = 'u8[262144]{0}', space=vmem, size = 0x40000, scoped, tag = 'output window, operand 0']
    #allocation4 [shape = 's32[2]{0}', space=sflag, size = 0x8, scoped, tag = 'scoped memory for tpu_custom_call.1']
    %9 = vsyncpa [#allocation4], 0
    %s10 = scalar_lea.sflag [#allocation4], 1
    %11 = vsyncpa %s10, 0
    loop: start=0, step=1, limit=4
    $region2: #{tpu_custom_call.1} parent=1 // loop_pre_header
      _
    $region3: #{tpu_custom_call.1} parent=1 // loop_header
      %s13 = sphi 0, %s17
      %p14 = scmp.ge.s32.totalorder %s13, 4
      %s20 = sphi 0, %s39
      %s21 = sphi 0, %s35
      %s22 = sphi 0, %s31
      %s23 = sphi 0, %s20
      %s24 = sphi 0, %s21
      %s25 = sphi 0, %s22
      %s26 = sphi 0, %s23
      %s27 = sphi 0, %s24
      %s28 = sphi 0, %s25
      %s44 = sphi 0, %s46
      %s47 = sphi 0, %s44
      %s48 = sphi 0, %s47
      %s64 = sphi 0, %s48
      %s76 = sphi 0, %s78
      %s79 = sphi 0, %s76
      %s80 = sphi 0, %s79
      %s96 = sphi 0, %s80
      %s102 = sphi 0, %s104
      %s105 = sphi 0, %s102
      %s106 = sphi 0, %s105
      %s122 = sphi 0, %s106
      %s128 = sphi 0, %s130
      %s131 = sphi 0, %s128
      %s132 = sphi 0, %s131
      %s148 = sphi 0, %s132
      %s158 = sphi 0, %s160
      %s161 = sphi 0, %s158
      %s162 = sphi 0, %s161
      %s178 = sphi 0, %s162
    $region4: #{tpu_custom_call.1} parent=1 // loop_header_branch
      %16 = sbr.rel (%p14) target = $region8
    $region5: #{tpu_custom_call.1} parent=1 // loop_body
      %s18 = ssub.s32 %s13, 1
      %s19 = ssub.s32 %s13, 2
      %s29 = sadd.s32 1, %s22
      %p30 = scmp.ge.s32.totalorder %s29, 1
      %s31 = scalar_select %p30, 0, %s29
      %s32 = sadd.s32 1, %s21
      %s33 = scalar_select %p30, %s32, %s21
      %p34 = scmp.ge.s32.totalorder %s33, 1
      %s35 = scalar_select %p34, 0, %s33
      %s36 = sadd.s32 1, %s20
      %s37 = scalar_select %p34, %s36, %s20
      %p38 = scmp.ge.s32.totalorder %s37, 2
      %s39 = scalar_select %p38, 0, %s37
      %s40 = ssub.s32 %s20, %s39
      %s41 = ssub.s32 %s22, %s31
      %s42 = sor.u32 %s40, %s41
      %p43 = scmp.eq.s32.totalorder %s42, 0
      %s45 = sadd.s32 %s44, 1
      %s46 = scalar_select %p43, %s44, %s45
      %p49 = pneg %p43
      %p50 = scmp.eq.s32.totalorder %s13, 1
      %p51 = por %p49, %p50
      %p52 = scmp.ne.s32.totalorder %s44, %s47
      %p53 = scmp.eq.s32.totalorder %s13, 0
      %p54 = por %p52, %p53
      %p55 = scmp.ne.s32.totalorder %s44, %s47
      %p56 = scmp.eq.s32.totalorder %s18, 1
      %p57 = por %p55, %p56
      %p58 = scmp.ne.s32.totalorder %s47, %s48
      %p59 = scmp.eq.s32.totalorder %s18, 0
      %p60 = por %p58, %p59
      %p61 = scmp.ne.s32.totalorder %s47, %s48
      %p62 = scmp.eq.s32.totalorder %s19, 1
      %p63 = por %p61, %p62
      %p65 = scmp.ne.s32.totalorder %s48, %s64
      %p66 = scmp.eq.s32.totalorder %s19, 0
      %p67 = por %p65, %p66
      %s68 = sadd.s32 %s22, 1
      %s69 = smul.u32 %s68, 8
      %s70 = sadd.s32 %s31, 1
      %s71 = smul.u32 %s70, 8
      %s72 = ssub.s32 %s20, %s39
      %s73 = ssub.s32 %s69, %s71
      %s74 = sor.u32 %s72, %s73
      %p75 = scmp.eq.s32.totalorder %s74, 0
      %s77 = sadd.s32 %s76, 1
      %s78 = scalar_select %p75, %s76, %s77
      %p81 = pneg %p75
      %p82 = scmp.eq.s32.totalorder %s13, 1
      %p83 = por %p81, %p82
      %p84 = scmp.ne.s32.totalorder %s76, %s79
      %p85 = scmp.eq.s32.totalorder %s13, 0
      %p86 = por %p84, %p85
      %p87 = scmp.ne.s32.totalorder %s76, %s79
      %p88 = scmp.eq.s32.totalorder %s18, 1
      %p89 = por %p87, %p88
      %p90 = scmp.ne.s32.totalorder %s79, %s80
      %p91 = scmp.eq.s32.totalorder %s18, 0
      %p92 = por %p90, %p91
      %p93 = scmp.ne.s32.totalorder %s79, %s80
      %p94 = scmp.eq.s32.totalorder %s19, 1
      %p95 = por %p93, %p94
      %p97 = scmp.ne.s32.totalorder %s80, %s96
      %p98 = scmp.eq.s32.totalorder %s19, 0
      %p99 = por %p97, %p98
      %s100 = ssub.s32 %s21, %s35
      %p101 = scmp.eq.s32.totalorder %s100, 0
      %s103 = sadd.s32 %s102, 1
      %s104 = scalar_select %p101, %s102, %s103
      %p107 = pneg %p101
      %p108 = scmp.eq.s32.totalorder %s13, 1
      %p109 = por %p107, %p108
      %p110 = scmp.ne.s32.totalorder %s102, %s105
      %p111 = scmp.eq.s32.totalorder %s13, 0
      %p112 = por %p110, %p111
      %p113 = scmp.ne.s32.totalorder %s102, %s105
      %p114 = scmp.eq.s32.totalorder %s18, 1
      %p115 = por %p113, %p114
      %p116 = scmp.ne.s32.totalorder %s105, %s106
      %p117 = scmp.eq.s32.totalorder %s18, 0
      %p118 = por %p116, %p117
      %p119 = scmp.ne.s32.totalorder %s105, %s106
      %p120 = scmp.eq.s32.totalorder %s19, 1
      %p121 = por %p119, %p120
      %p123 = scmp.ne.s32.totalorder %s106, %s122
      %p124 = scmp.eq.s32.totalorder %s19, 0
      %p125 = por %p123, %p124
      %s126 = ssub.s32 %s21, %s35
      %p127 = scmp.eq.s32.totalorder %s126, 0
      %s129 = sadd.s32 %s128, 1
      %s130 = scalar_select %p127, %s128, %s129
      %p133 = pneg %p127
      %p134 = scmp.eq.s32.totalorder %s13, 1
      %p135 = por %p133, %p134
      %p136 = scmp.ne.s32.totalorder %s128, %s131
      %p137 = scmp.eq.s32.totalorder %s13, 0
      %p138 = por %p136, %p137
      %p139 = scmp.ne.s32.totalorder %s128, %s131
      %p140 = scmp.eq.s32.totalorder %s18, 1
      %p141 = por %p139, %p140
      %p142 = scmp.ne.s32.totalorder %s131, %s132
      %p143 = scmp.eq.s32.totalorder %s18, 0
      %p144 = por %p142, %p143
      %p145 = scmp.ne.s32.totalorder %s131, %s132
      %p146 = scmp.eq.s32.totalorder %s19, 1
      %p147 = por %p145, %p146
      %p149 = scmp.ne.s32.totalorder %s132, %s148
      %p150 = scmp.eq.s32.totalorder %s19, 0
      %p151 = por %p149, %p150
      %s152 = ssub.s32 %s20, %s39
      %s153 = ssub.s32 %s22, %s31
      %s154 = sor.u32 %s152, %s153
      %s155 = ssub.s32 %s21, %s35
      %s156 = sor.u32 %s154, %s155
      %p157 = scmp.eq.s32.totalorder %s156, 0
      %s159 = sadd.s32 %s158, 1
      %s160 = scalar_select %p157, %s158, %s159
      %p163 = pneg %p157
      %p164 = scmp.eq.s32.totalorder %s13, 1
      %p165 = por %p163, %p164
      %p166 = scmp.ne.s32.totalorder %s158, %s161
      %p167 = scmp.eq.s32.totalorder %s13, 0
      %p168 = por %p166, %p167
      %p169 = scmp.ne.s32.totalorder %s158, %s161
      %p170 = scmp.eq.s32.totalorder %s18, 1
      %p171 = por %p169, %p170
      %p172 = scmp.ne.s32.totalorder %s161, %s162
      %p173 = scmp.eq.s32.totalorder %s18, 0
      %p174 = por %p172, %p173
      %p175 = scmp.ne.s32.totalorder %s161, %s162
      %p176 = scmp.eq.s32.totalorder %s19, 1
      %p177 = por %p175, %p176
      %p179 = scmp.ne.s32.totalorder %s162, %s178
      %p180 = scmp.eq.s32.totalorder %s19, 0
      %p181 = por %p179, %p180
      %p182 = scmp.le.s32.totalorder 1, %s13
      %p183 = scmp.lt.s32.totalorder %s13, 3
      %p184 = pnand %p182, %p183
      %p185 = pneg %p184
      // Predicated region
      $region9: #{tpu_custom_call.1} parent=5 // pred_check
        _
      $region10: #{tpu_custom_call.1} parent=5 // pred_check_branch
        %187 = sbr.rel (%p184) target = $region12
      $region11: #{tpu_custom_call.1} parent=5 // pred_region
        %s188 = ssub.s32 %s13, 1
        // Predicated region
        $region13: #{tpu_custom_call.1} parent=11 // pred_check
          %p189 = pneg %p118
        $region14: #{tpu_custom_call.1} parent=11 // pred_check_branch
          %191 = sbr.rel (%p189) target = $region16
        $region15: #{tpu_custom_call.1} parent=11 // pred_region
          %p192 = scmp.lt.s32.totalorder %s24, 0
          %s193 = scalar_select %p192, %s24, 0
          %s194 = smul.addr %s193, 4
          %s195 = scalar_lea.vmem %s2, %s194
        $region16: #{tpu_custom_call.1} parent=11 // pred_fallthru
          _
        // Predicated region
        $region17: #{tpu_custom_call.1} parent=11 // pred_check
          %p196 = pneg %p144
        $region18: #{tpu_custom_call.1} parent=11 // pred_check_branch
          %198 = sbr.rel (%p196) target = $region20
        $region19: #{tpu_custom_call.1} parent=11 // pred_region
          %p199 = scmp.lt.s32.totalorder %s24, 0
          %s200 = scalar_select %p199, %s24, 0
          %s201 = scalar_lea.vmem %s3, %s200
        $region20: #{tpu_custom_call.1} parent=11 // pred_fallthru
          _
      $region12: #{tpu_custom_call.1} parent=5 // pred_fallthru
        _
      %p202 = scmp.lt.s32.totalorder %s13, 2
      // Predicated region
      $region21: #{tpu_custom_call.1} parent=5 // pred_check
        %p203 = pneg %p202
      $region22: #{tpu_custom_call.1} parent=5 // pred_check_branch
        %205 = sbr.rel (%p203) target = $region24
      $region23: #{tpu_custom_call.1} parent=5 // pred_region
        // Predicated region
        $region25: #{tpu_custom_call.1} parent=23 // pred_check
          %p206 = pneg %p54
        $region26: #{tpu_custom_call.1} parent=23 // pred_check_branch
          %208 = sbr.rel (%p206) target = $region28
        $region27: #{tpu_custom_call.1} parent=23 // pred_region
          %s209 = smul.u32 32, %s22
          %s210 = ssub.s32 36, %s209
          %p211 = scmp.lt.s32.totalorder %s210, 32
          %s212 = scalar_select %p211, %s210, 32
          %s213 = smul.u32 64, %s212
          %p214 = scmp.lt.s32.totalorder %s20, 1
          %s215 = scalar_select %p214, %s20, 1
          %p216 = scmp.lt.s32.totalorder %s209, 35
          %s217 = scalar_select %p216, %s209, 35
          %s218 = smul.addr %s215, 36
          %s219 = sadd.s32 %s217, %s218
          %s220 = smul.addr %s219, 4
          %s221 = scalar_lea.vmem %s0, %s220
          %s222 = smul.u32 32, %s22
          %s223 = ssub.s32 36, %s222
          %p224 = scmp.lt.s32.totalorder %s223, 32
          %s225 = scalar_select %p224, %s223, 32
          %s226 = smul.u32 64, %s225
        $region28: #{tpu_custom_call.1} parent=23 // pred_fallthru
          _
        // Predicated region
        $region29: #{tpu_custom_call.1} parent=23 // pred_check
          %p227 = pneg %p86
        $region30: #{tpu_custom_call.1} parent=23 // pred_check_branch
          %229 = sbr.rel (%p227) target = $region32
        $region31: #{tpu_custom_call.1} parent=23 // pred_region
          %s230 = sadd.s32 %s22, 1
          %s231 = smul.u32 %s230, 8
          %s232 = smul.u32 4, %s231
          %p233 = scmp.lt.s32.totalorder %s20, 1
          %s234 = scalar_select %p233, %s20, 1
          %p235 = scmp.lt.s32.totalorder %s232, 35
          %s236 = scalar_select %p235, %s232, 35
          %s237 = smul.addr %s234, 36
          %s238 = sadd.s32 %s236, %s237
          %s239 = smul.addr %s238, 4
          %s240 = scalar_lea.vmem %s1, %s239
          %s241 = sadd.s32 %s22, 1
          %s242 = smul.u32 %s241, 8
          %s243 = smul.u32 4, %s242
        $region32: #{tpu_custom_call.1} parent=23 // pred_fallthru
          _
      $region24: #{tpu_custom_call.1} parent=5 // pred_fallthru
        _
      %p244 = scmp.le.s32.totalorder 1, %s13
      %p245 = scmp.lt.s32.totalorder %s13, 3
      %p246 = pnand %p244, %p245
      %p247 = pneg %p246
      // Predicated region
      $region33: #{tpu_custom_call.1} parent=5 // pred_check
        _
      $region34: #{tpu_custom_call.1} parent=5 // pred_check_branch
        %249 = sbr.rel (%p246) target = $region36
      $region35: #{tpu_custom_call.1} parent=5 // pred_region
        %s250 = ssub.s32 %s13, 1
        %s251 = smul.u32 32, %s25
        %s252 = ssub.s32 36, %s251
        %p253 = scmp.lt.s32.totalorder %s252, 32
        %s254 = scalar_select %p253, %s252, 32
        %s255 = smul.u32 64, %s254
        %p256 = scmp.lt.s32.totalorder %s23, 1
        %s257 = scalar_select %p256, %s23, 1
        %p258 = scmp.lt.s32.totalorder %s251, 35
        %s259 = scalar_select %p258, %s251, 35
        %s260 = smul.addr %s257, 36
        %s261 = sadd.s32 %s259, %s260
        %s262 = smul.addr %s261, 4
        %s263 = scalar_lea.vmem %s0, %s262
        %p264 = pneg %p60
        %p265 = pneg %p57
        %s266 = sadd.s32 %s25, 1
        %s267 = smul.u32 %s266, 8
        %s268 = smul.u32 4, %s267
        %p269 = scmp.lt.s32.totalorder %s23, 1
        %s270 = scalar_select %p269, %s23, 1
        %p271 = scmp.lt.s32.totalorder %s268, 35
        %s272 = scalar_select %p271, %s268, 35
        %s273 = smul.addr %s270, 36
        %s274 = sadd.s32 %s272, %s273
        %s275 = smul.addr %s274, 4
        %s276 = scalar_lea.vmem %s1, %s275
        %p277 = pneg %p92
        %p278 = pneg %p89
        %p279 = scmp.lt.s32.totalorder %s24, 0
        %s280 = scalar_select %p279, %s24, 0
        %s281 = smul.addr %s280, 4
        %s282 = scalar_lea.vmem %s2, %s281
        %p283 = pneg %p118
        %p284 = pneg %p115
        %p285 = scmp.lt.s32.totalorder %s24, 0
        %s286 = scalar_select %p285, %s24, 0
        %s287 = scalar_lea.vmem %s3, %s286
        %p288 = pneg %p144
        %p289 = pneg %p141
        %p290 = pneg %p174
        %p291 = pneg %p171
        %s292 = sand.u32 %s161, 1
        %s293 = scalar_lea.sflag [#allocation4], %s292
        %s294 = sand.u32 %s161, 1
        %s295 = smul.addr %s294, 256
        %s296 = scalar_lea.vmem [#allocation3], %s295
        %s297 = smul.u32 32, %s25
        %s298 = ssub.s32 36, %s297
        %p299 = scmp.lt.s32.totalorder %s298, 32
        %s300 = scalar_select %p299, %s298, 32
        %s301 = smul.u32 64, %s300
        %p302 = scmp.lt.s32.totalorder %s23, 1
        %s303 = scalar_select %p302, %s23, 1
        %p304 = scmp.lt.s32.totalorder %s297, 35
        %s305 = scalar_select %p304, %s297, 35
        %s306 = smul.addr %s303, 36
        %s307 = sadd.s32 %s305, %s306
        %s308 = smul.addr %s307, 4
        %s309 = scalar_lea.vmem %s0, %s308
        %s310 = smul.u32 32, %s25
        %s311 = ssub.s32 36, %s310
        %p312 = scmp.lt.s32.totalorder %s311, 32
        %s313 = scalar_select %p312, %s311, 32
        %s314 = smul.u32 64, %s313
        %s315 = sadd.s32 %s25, 1
        %s316 = smul.u32 %s315, 8
        %s317 = smul.u32 4, %s316
        %p318 = scmp.lt.s32.totalorder %s23, 1
        %s319 = scalar_select %p318, %s23, 1
        %p320 = scmp.lt.s32.totalorder %s317, 35
        %s321 = scalar_select %p320, %s317, 35
        %s322 = smul.addr %s319, 36
        %s323 = sadd.s32 %s321, %s322
        %s324 = smul.addr %s323, 4
        %s325 = scalar_lea.vmem %s1, %s324
        %s326 = sadd.s32 %s25, 1
        %s327 = smul.u32 %s326, 8
        %s328 = smul.u32 4, %s327
        %p329 = scmp.lt.s32.totalorder %s24, 0
        %s330 = scalar_select %p329, %s24, 0
        %s331 = smul.addr %s330, 4
        %s332 = scalar_lea.vmem %s2, %s331
        %p333 = scmp.lt.s32.totalorder %s24, 0
        %s334 = scalar_select %p333, %s24, 0
        %s335 = scalar_lea.vmem %s3, %s334
        %s336 = smul.u32 32, %s25
        %v338 = vld [vmem:[%s309] sm:$0xf]
        %v339 = vld [vmem:[%s309 + $0x4] sm:$0xf]
        %v340 = vld [vmem:[%s309 + $0x8] sm:$0xf]
        %v341 = vld [vmem:[%s309 + $0xc] sm:$0xf]
        %v342 = vld [vmem:[%s309 + $0x10] sm:$0xf]
        %v343 = vld [vmem:[%s309 + $0x14] sm:$0xf]
        %v344 = vld [vmem:[%s309 + $0x18] sm:$0xf]
        %v345 = vld [vmem:[%s309 + $0x1c] sm:$0xf]
        %v346 = vld [vmem:[%s309 + $0x20] sm:$0xf]
        %v347 = vld [vmem:[%s309 + $0x24] sm:$0xf]
        %v348 = vld [vmem:[%s309 + $0x28] sm:$0xf]
        %v349 = vld [vmem:[%s309 + $0x2c] sm:$0xf]
        %v350 = vld [vmem:[%s309 + $0x30] sm:$0xf]
        %v351 = vld [vmem:[%s309 + $0x34] sm:$0xf]
        %v352 = vld [vmem:[%s309 + $0x38] sm:$0xf]
        %v353 = vld [vmem:[%s309 + $0x3c] sm:$0xf]
        %v354 = vld [vmem:[%s309 + $0x40] sm:$0xf]
        %v355 = vld [vmem:[%s309 + $0x44] sm:$0xf]
        %v356 = vld [vmem:[%s309 + $0x48] sm:$0xf]
        %v357 = vld [vmem:[%s309 + $0x4c] sm:$0xf]
        %v358 = vld [vmem:[%s309 + $0x50] sm:$0xf]
        %v359 = vld [vmem:[%s309 + $0x54] sm:$0xf]
        %v360 = vld [vmem:[%s309 + $0x58] sm:$0xf]
        %v361 = vld [vmem:[%s309 + $0x5c] sm:$0xf]
        %v362 = vld [vmem:[%s309 + $0x60] sm:$0xf]
        %v363 = vld [vmem:[%s309 + $0x64] sm:$0xf]
        %v364 = vld [vmem:[%s309 + $0x68] sm:$0xf]
        %v365 = vld [vmem:[%s309 + $0x6c] sm:$0xf]
        %v366 = vld [vmem:[%s309 + $0x70] sm:$0xf]
        %v367 = vld [vmem:[%s309 + $0x74] sm:$0xf]
        %v368 = vld [vmem:[%s309 + $0x78] sm:$0xf]
        %v369 = vld [vmem:[%s309 + $0x7c] sm:$0xf]
        %v370 = vld [vmem:[%s332] sm:$0xf]
        %v371 = vld [vmem:[%s332 + $0x4] sm:$0x3]
        %v404 = vunpack.c.l.b16 %v338
        %v405 = vunpack.c.l.b16 %v339
        %v406 = vunpack.c.l.b16 %v340
        %v407 = vunpack.c.l.b16 %v341
        %v408 = vunpack.c.l.b16 %v342
        %v409 = vunpack.c.l.b16 %v343
        %v410 = vunpack.c.l.b16 %v344
        %v411 = vunpack.c.l.b16 %v345
        %v412 = vunpack.c.l.b16 %v346
        %v413 = vunpack.c.l.b16 %v347
        %v414 = vunpack.c.l.b16 %v348
        %v415 = vunpack.c.l.b16 %v349
        %v416 = vunpack.c.l.b16 %v350
        %v417 = vunpack.c.l.b16 %v351
        %v418 = vunpack.c.l.b16 %v352
        %v419 = vunpack.c.l.b16 %v353
        %v420 = vunpack.c.l.b16 %v354
        %v421 = vunpack.c.l.b16 %v355
        %v422 = vunpack.c.l.b16 %v356
        %v423 = vunpack.c.l.b16 %v357
        %v424 = vunpack.c.l.b16 %v358
        %v425 = vunpack.c.l.b16 %v359
        %v426 = vunpack.c.l.b16 %v360
        %v427 = vunpack.c.l.b16 %v361
        %v428 = vunpack.c.l.b16 %v362
        %v429 = vunpack.c.l.b16 %v363
        %v430 = vunpack.c.l.b16 %v364
        %v431 = vunpack.c.l.b16 %v365
        %v432 = vunpack.c.l.b16 %v366
        %v433 = vunpack.c.l.b16 %v367
        %v434 = vunpack.c.l.b16 %v368
        %v435 = vunpack.c.l.b16 %v369
        %v436 = vpack.c.b16 %v405, %v404
        %v437 = vpack.c.b16 %v407, %v406
        %v438 = vpack.c.b16 %v409, %v408
        %v439 = vpack.c.b16 %v411, %v410
        %v440 = vpack.c.b16 %v413, %v412
        %v441 = vpack.c.b16 %v415, %v414
        %v442 = vpack.c.b16 %v417, %v416
        %v443 = vpack.c.b16 %v419, %v418
        %v444 = vpack.c.b16 %v421, %v420
        %v445 = vpack.c.b16 %v423, %v422
        %v446 = vpack.c.b16 %v425, %v424
        %v447 = vpack.c.b16 %v427, %v426
        %v448 = vpack.c.b16 %v429, %v428
        %v449 = vpack.c.b16 %v431, %v430
        %v450 = vpack.c.b16 %v433, %v432
        %v451 = vpack.c.b16 %v435, %v434
        %v454 = vunpack.c.l.b16 %v370
        %v455 = vunpack.c.l.b16 %v371
        %v456 = vpack.c.b16 %v455, %v454
        %vm457 = vcmask 97280
        %v459 = vsel %vm457, %v436, 0
        %v462 = vsel %vm457, %v437, 0
        %v465 = vsel %vm457, %v438, 0
        %v468 = vsel %vm457, %v439, 0
        %v471 = vsel %vm457, %v440, 0
        %v474 = vsel %vm457, %v441, 0
        %v477 = vsel %vm457, %v442, 0
        %v480 = vsel %vm457, %v443, 0
        %v483 = vsel %vm457, %v444, 0
        %v486 = vsel %vm457, %v445, 0
        %v489 = vsel %vm457, %v446, 0
        %v492 = vsel %vm457, %v447, 0
        %v495 = vsel %vm457, %v448, 0
        %v498 = vsel %vm457, %v449, 0
        %v501 = vsel %vm457, %v450, 0
        %v504 = vsel %vm457, %v451, 0
        %vm506 = vcmask 1045504
        %v508 = vsel %vm506, %v456, 0
        %510 = vmatprep.subr.bf16.mxu0 0
        %511 = vmatpush1.bf16.msra.mxu0 %v508
        %512 = vmatprep.subr.bf16.mxu0 0
        %513 = vmatpush1.bf16.msra.mxu0 0
        %514 = vmatprep.subr.bf16.mxu0 0
        %515 = vmatpush1.bf16.msra.mxu0 0
        %516 = vmatprep.subr.bf16.mxu0 0
        %517 = vmatpush1.bf16.msra.mxu0 0
        %518 = vmatprep.subr.bf16.mxu0 0
        %519 = vmatpush1.bf16.msra.mxu0 0
        %520 = vmatprep.subr.bf16.mxu0 0
        %521 = vmatpush1.bf16.msra.mxu0 0
        %522 = vmatprep.subr.bf16.mxu0 0
        %523 = vmatpush1.bf16.msra.mxu0 0
        %524 = vmatprep.subr.bf16.mxu0 0
        %525 = vmatpush1.bf16.msra.mxu0 0
        %526 = vmatprep.subr.bf16.mxu0 0
        %527 = vmatpush1.bf16.msra.mxu0 0
        %528 = vmatprep.subr.bf16.mxu0 0
        %529 = vmatpush1.bf16.msra.mxu0 0
        %530 = vmatprep.subr.bf16.mxu0 0
        %531 = vmatpush1.bf16.msra.mxu0 0
        %532 = vmatprep.subr.bf16.mxu0 0
        %533 = vmatpush1.bf16.msra.mxu0 0
        %534 = vmatprep.subr.bf16.mxu0 0
        %535 = vmatpush1.bf16.msra.mxu0 0
        %536 = vmatprep.subr.bf16.mxu0 0
        %537 = vmatpush1.bf16.msra.mxu0 0
        %538 = vmatprep.subr.bf16.mxu0 0
        %539 = vmatpush1.bf16.msra.mxu0 0
        %540 = vmatprep.subr.bf16.mxu0 0
        %541 = vmatpush1.bf16.msra.mxu0 0
        %542 = vmatprep.mubr.bf16.mxu0 0
        %543 = vmatmul.mubr.bf16.gmra.mrb[0].mxu0 %v459
        %v544 = vpop.f32.mrb[0].mxu0
        %v545 = vadd.f32 0.0, %v544
        %v546 = vpop.f32.mrb[0].mxu0
        %v547 = vpop.f32.mrb[0].mxu0
        %v548 = vadd.f32 0.0, %v547
        %v549 = vpop.f32.mrb[0].mxu0
        %550 = vmatprep.mubr.bf16.mxu0 0
        %551 = vmatmul.mubr.bf16.gmra.mrb[0].mxu0 %v462
        %v552 = vpop.f32.mrb[0].mxu0
        %v553 = vadd.f32 0.0, %v552
        %v554 = vpop.f32.mrb[0].mxu0
        %v555 = vpop.f32.mrb[0].mxu0
        %v556 = vadd.f32 0.0, %v555
        %v557 = vpop.f32.mrb[0].mxu0
        %558 = vmatprep.mubr.bf16.mxu0 0
        %559 = vmatmul.mubr.bf16.gmra.mrb[0].mxu0 %v465
        %v560 = vpop.f32.mrb[0].mxu0
        %v561 = vadd.f32 0.0, %v560
        %v562 = vpop.f32.mrb[0].mxu0
        %v563 = vpop.f32.mrb[0].mxu0
        %v564 = vadd.f32 0.0, %v563
        %v565 = vpop.f32.mrb[0].mxu0
        %566 = vmatprep.mubr.bf16.mxu0 0
        %567 = vmatmul.mubr.bf16.gmra.mrb[0].mxu0 %v468
        %v568 = vpop.f32.mrb[0].mxu0
        %v569 = vadd.f32 0.0, %v568
        %v570 = vpop.f32.mrb[0].mxu0
        %v571 = vpop.f32.mrb[0].mxu0
        %v572 = vadd.f32 0.0, %v571
        %v573 = vpop.f32.mrb[0].mxu0
        %574 = vmatprep.mubr.bf16.mxu0 0
        %575 = vmatmul.mubr.bf16.gmra.mrb[0].mxu0 %v471
        %v576 = vpop.f32.mrb[0].mxu0
        %v577 = vadd.f32 0.0, %v576
        %v578 = vpop.f32.mrb[0].mxu0
        %v579 = vpop.f32.mrb[0].mxu0
        %v580 = vadd.f32 0.0, %v579
        %v581 = vpop.f32.mrb[0].mxu0
        %582 = vmatprep.mubr.bf16.mxu0 0
        %583 = vmatmul.mubr.bf16.gmra.mrb[0].mxu0 %v474
        %v584 = vpop.f32.mrb[0].mxu0
        %v585 = vadd.f32 0.0, %v584
        %v586 = vpop.f32.mrb[0].mxu0
        %v587 = vpop.f32.mrb[0].mxu0
        %v588 = vadd.f32 0.0, %v587
        %v589 = vpop.f32.mrb[0].mxu0
        %590 = vmatprep.mubr.bf16.mxu0 0
        %591 = vmatmul.mubr.bf16.gmra.mrb[0].mxu0 %v477
        %v592 = vpop.f32.mrb[0].mxu0
        %v593 = vadd.f32 0.0, %v592
        %v594 = vpop.f32.mrb[0].mxu0
        %v595 = vpop.f32.mrb[0].mxu0
        %v596 = vadd.f32 0.0, %v595
        %v597 = vpop.f32.mrb[0].mxu0
        %598 = vmatprep.mubr.bf16.mxu0 0
        %599 = vmatmul.mubr.bf16.gmra.mrb[0].mxu0 %v480
        %v600 = vpop.f32.mrb[0].mxu0
        %v601 = vadd.f32 0.0, %v600
        %v602 = vpop.f32.mrb[0].mxu0
        %v603 = vpop.f32.mrb[0].mxu0
        %v604 = vadd.f32 0.0, %v603
        %v605 = vpop.f32.mrb[0].mxu0
        %606 = vmatprep.mubr.bf16.mxu0 0
        %607 = vmatmul.mubr.bf16.gmra.mrb[0].mxu0 %v483
        %v608 = vpop.f32.mrb[0].mxu0
        %v609 = vadd.f32 0.0, %v608
        %v610 = vpop.f32.mrb[0].mxu0
        %v611 = vpop.f32.mrb[0].mxu0
        %v612 = vadd.f32 0.0, %v611
        %v613 = vpop.f32.mrb[0].mxu0
        %614 = vmatprep.mubr.bf16.mxu0 0
        %615 = vmatmul.mubr.bf16.gmra.mrb[0].mxu0 %v486
        %v616 = vpop.f32.mrb[0].mxu0
        %v617 = vadd.f32 0.0, %v616
        %v618 = vpop.f32.mrb[0].mxu0
        %v619 = vpop.f32.mrb[0].mxu0
        %v620 = vadd.f32 0.0, %v619
        %v621 = vpop.f32.mrb[0].mxu0
        %622 = vmatprep.mubr.bf16.mxu0 0
        %623 = vmatmul.mubr.bf16.gmra.mrb[0].mxu0 %v489
        %v624 = vpop.f32.mrb[0].mxu0
        %v625 = vadd.f32 0.0, %v624
        %v626 = vpop.f32.mrb[0].mxu0
        %v627 = vpop.f32.mrb[0].mxu0
        %v628 = vadd.f32 0.0, %v627
        %v629 = vpop.f32.mrb[0].mxu0
        %630 = vmatprep.mubr.bf16.mxu0 0
        %631 = vmatmul.mubr.bf16.gmra.mrb[0].mxu0 %v492
        %v632 = vpop.f32.mrb[0].mxu0
        %v633 = vadd.f32 0.0, %v632
        %v634 = vpop.f32.mrb[0].mxu0
        %v635 = vpop.f32.mrb[0].mxu0
        %v636 = vadd.f32 0.0, %v635
        %v637 = vpop.f32.mrb[0].mxu0
        %638 = vmatprep.mubr.bf16.mxu0 0
        %639 = vmatmul.mubr.bf16.gmra.mrb[0].mxu0 %v495
        %v640 = vpop.f32.mrb[0].mxu0
        %v641 = vadd.f32 0.0, %v640
        %v642 = vpop.f32.mrb[0].mxu0
        %v643 = vpop.f32.mrb[0].mxu0
        %v644 = vadd.f32 0.0, %v643
        %v645 = vpop.f32.mrb[0].mxu0
        %646 = vmatprep.mubr.bf16.mxu0 0
        %647 = vmatmul.mubr.bf16.gmra.mrb[0].mxu0 %v498
        %v648 = vpop.f32.mrb[0].mxu0
        %v649 = vadd.f32 0.0, %v648
        %v650 = vpop.f32.mrb[0].mxu0
        %v651 = vpop.f32.mrb[0].mxu0
        %v652 = vadd.f32 0.0, %v651
        %v653 = vpop.f32.mrb[0].mxu0
        %654 = vmatprep.mubr.bf16.mxu0 0
        %655 = vmatmul.mubr.bf16.gmra.mrb[0].mxu0 %v501
        %v656 = vpop.f32.mrb[0].mxu0
        %v657 = vadd.f32 0.0, %v656
        %v658 = vpop.f32.mrb[0].mxu0
        %v659 = vpop.f32.mrb[0].mxu0
        %v660 = vadd.f32 0.0, %v659
        %v661 = vpop.f32.mrb[0].mxu0
        %662 = vmatprep.mubr.bf16.mxu0 0
        %663 = vmatmul.mubr.bf16.gmra.mrb[0].mxu0 %v504
        %v664 = vpop.f32.mrb[0].mxu0
        %v665 = vadd.f32 0.0, %v664
        %v666 = vpop.f32.mrb[0].mxu0
        %v667 = vpop.f32.mrb[0].mxu0
        %v668 = vadd.f32 0.0, %v667
        %v669 = vpop.f32.mrb[0].mxu0
        %670 = vdwg.mxu0
        %671 = vst [vmem:[#allocation2] sm:$0xff] %v545
        %672 = vst [vmem:[#allocation2 + $0x8] sm:$0xff] %v548
        %673 = vst [vmem:[#allocation2 + $0x10] sm:$0xff] %v553
        %674 = vst [vmem:[#allocation2 + $0x18] sm:$0xff] %v556
        %675 = vst [vmem:[#allocation2 + $0x20] sm:$0xff] %v561
        %676 = vst [vmem:[#allocation2 + $0x28] sm:$0xff] %v564
        %677 = vst [vmem:[#allocation2 + $0x30] sm:$0xff] %v569
        %678 = vst [vmem:[#allocation2 + $0x38] sm:$0xff] %v572
        %679 = vst [vmem:[#allocation2 + $0x40] sm:$0xff] %v577
        %680 = vst [vmem:[#allocation2 + $0x48] sm:$0xff] %v580
        %681 = vst [vmem:[#allocation2 + $0x50] sm:$0xff] %v585
        %682 = vst [vmem:[#allocation2 + $0x58] sm:$0xff] %v588
        %683 = vst [vmem:[#allocation2 + $0x60] sm:$0xff] %v593
        %684 = vst [vmem:[#allocation2 + $0x68] sm:$0xff] %v596
        %685 = vst [vmem:[#allocation2 + $0x70] sm:$0xff] %v601
        %686 = vst [vmem:[#allocation2 + $0x78] sm:$0xff] %v604
        %687 = vst [vmem:[#allocation2 + $0x80] sm:$0xff] %v609
        %688 = vst [vmem:[#allocation2 + $0x88] sm:$0xff] %v612
        %689 = vst [vmem:[#allocation2 + $0x90] sm:$0xff] %v617
        %690 = vst [vmem:[#allocation2 + $0x98] sm:$0xff] %v620
        %691 = vst [vmem:[#allocation2 + $0xa0] sm:$0xff] %v625
        %692 = vst [vmem:[#allocation2 + $0xa8] sm:$0xff] %v628
        %693 = vst [vmem:[#allocation2 + $0xb0] sm:$0xff] %v633
        %694 = vst [vmem:[#allocation2 + $0xb8] sm:$0xff] %v636
        %695 = vst [vmem:[#allocation2 + $0xc0] sm:$0xff] %v641
        %696 = vst [vmem:[#allocation2 + $0xc8] sm:$0xff] %v644
        %697 = vst [vmem:[#allocation2 + $0xd0] sm:$0xff] %v649
        %698 = vst [vmem:[#allocation2 + $0xd8] sm:$0xff] %v652
        %699 = vst [vmem:[#allocation2 + $0xe0] sm:$0xff] %v657
        %700 = vst [vmem:[#allocation2 + $0xe8] sm:$0xff] %v660
        %701 = vst [vmem:[#allocation2 + $0xf0] sm:$0xff] %v665
        %702 = vst [vmem:[#allocation2 + $0xf8] sm:$0xff] %v668
        %v703 = vld [vmem:[%s325] sm:$0xf]
        %v704 = vld [vmem:[%s325 + $0x4] sm:$0xf]
        %v707 = vunpack.c.l.b16 %v703
        %v708 = vunpack.c.l.b16 %v704
        %v709 = vpack.c.b16 %v708, %v707
        %v710 = vld [vmem:[#allocation2] sm:$0xff]
        %v711 = vld [vmem:[#allocation2 + $0x8] sm:$0xff]
        %v712 = vld [vmem:[#allocation2 + $0x10] sm:$0xff]
        %v713 = vld [vmem:[#allocation2 + $0x18] sm:$0xff]
        %v714 = vld [vmem:[#allocation2 + $0x20] sm:$0xff]
        %v715 = vld [vmem:[#allocation2 + $0x28] sm:$0xff]
        %v716 = vld [vmem:[#allocation2 + $0x30] sm:$0xff]
        %v717 = vld [vmem:[#allocation2 + $0x38] sm:$0xff]
        %v718 = vld [vmem:[#allocation2 + $0x40] sm:$0xff]
        %v719 = vld [vmem:[#allocation2 + $0x48] sm:$0xff]
        %v720 = vld [vmem:[#allocation2 + $0x50] sm:$0xff]
        %v721 = vld [vmem:[#allocation2 + $0x58] sm:$0xff]
        %v722 = vld [vmem:[#allocation2 + $0x60] sm:$0xff]
        %v723 = vld [vmem:[#allocation2 + $0x68] sm:$0xff]
        %v724 = vld [vmem:[#allocation2 + $0x70] sm:$0xff]
        %v725 = vld [vmem:[#allocation2 + $0x78] sm:$0xff]
        %v726 = vld [vmem:[#allocation2 + $0x80] sm:$0xff]
        %v727 = vld [vmem:[#allocation2 + $0x88] sm:$0xff]
        %v728 = vld [vmem:[#allocation2 + $0x90] sm:$0xff]
        %v729 = vld [vmem:[#allocation2 + $0x98] sm:$0xff]
        %v730 = vld [vmem:[#allocation2 + $0xa0] sm:$0xff]
        %v731 = vld [vmem:[#allocation2 + $0xa8] sm:$0xff]
        %v732 = vld [vmem:[#allocation2 + $0xb0] sm:$0xff]
        %v733 = vld [vmem:[#allocation2 + $0xb8] sm:$0xff]
        %v734 = vld [vmem:[#allocation2 + $0xc0] sm:$0xff]
        %v735 = vld [vmem:[#allocation2 + $0xc8] sm:$0xff]
        %v736 = vld [vmem:[#allocation2 + $0xd0] sm:$0xff]
        %v737 = vld [vmem:[#allocation2 + $0xd8] sm:$0xff]
        %v738 = vld [vmem:[#allocation2 + $0xe0] sm:$0xff]
        %v739 = vld [vmem:[#allocation2 + $0xe8] sm:$0xff]
        %v740 = vld [vmem:[#allocation2 + $0xf0] sm:$0xff]
        %v741 = vld [vmem:[#allocation2 + $0xf8] sm:$0xff]
        %s742 = scalar_lea.vmem %s332, 8
        %v743 = vld [vmem:[%s742] sm:$0xf]
        %v744 = vld [vmem:[%s742 + $0x4] sm:$0x3]
        %v747 = vunpack.c.l.b16 %v743
        %v748 = vunpack.c.l.b16 %v744
        %v749 = vpack.c.b16 %v748, %v747
        %v751 = vsel %vm457, %v709, 0
        %v754 = vsel %vm506, %v749, 0
        %756 = vmatprep.subr.bf16.mxu0 0
        %757 = vmatpush1.bf16.msra.mxu0 %v754
        %758 = vmatprep.subr.bf16.mxu0 0
        %759 = vmatpush1.bf16.msra.mxu0 0
        %760 = vmatprep.subr.bf16.mxu0 0
        %761 = vmatpush1.bf16.msra.mxu0 0
        %762 = vmatprep.subr.bf16.mxu0 0
        %763 = vmatpush1.bf16.msra.mxu0 0
        %764 = vmatprep.subr.bf16.mxu0 0
        %765 = vmatpush1.bf16.msra.mxu0 0
        %766 = vmatprep.subr.bf16.mxu0 0
        %767 = vmatpush1.bf16.msra.mxu0 0
        %768 = vmatprep.subr.bf16.mxu0 0
        %769 = vmatpush1.bf16.msra.mxu0 0
        %770 = vmatprep.subr.bf16.mxu0 0
        %771 = vmatpush1.bf16.msra.mxu0 0
        %772 = vmatprep.subr.bf16.mxu0 0
        %773 = vmatpush1.bf16.msra.mxu0 0
        %774 = vmatprep.subr.bf16.mxu0 0
        %775 = vmatpush1.bf16.msra.mxu0 0
        %776 = vmatprep.subr.bf16.mxu0 0
        %777 = vmatpush1.bf16.msra.mxu0 0
        %778 = vmatprep.subr.bf16.mxu0 0
        %779 = vmatpush1.bf16.msra.mxu0 0
        %780 = vmatprep.subr.bf16.mxu0 0
        %781 = vmatpush1.bf16.msra.mxu0 0
        %782 = vmatprep.subr.bf16.mxu0 0
        %783 = vmatpush1.bf16.msra.mxu0 0
        %784 = vmatprep.subr.bf16.mxu0 0
        %785 = vmatpush1.bf16.msra.mxu0 0
        %786 = vmatprep.subr.bf16.mxu0 0
        %787 = vmatpush1.bf16.msra.mxu0 0
        %788 = vmatprep.mubr.bf16.mxu0 0
        %789 = vmatmul.mubr.bf16.gmra.mrb[0].mxu0 %v462
        %v790 = vpop.f32.mrb[0].mxu0
        %v791 = vadd.f32 0.0, %v790
        %v792 = vpop.f32.mrb[0].mxu0
        %v793 = vpop.f32.mrb[0].mxu0
        %v794 = vadd.f32 0.0, %v793
        %v795 = vpop.f32.mrb[0].mxu0
        %796 = vmatprep.mubr.bf16.mxu0 0
        %797 = vmatmul.mubr.bf16.gmra.mrb[0].mxu0 %v465
        %v798 = vpop.f32.mrb[0].mxu0
        %v799 = vadd.f32 0.0, %v798
        %v800 = vpop.f32.mrb[0].mxu0
        %v801 = vpop.f32.mrb[0].mxu0
        %v802 = vadd.f32 0.0, %v801
        %v803 = vpop.f32.mrb[0].mxu0
        %804 = vmatprep.mubr.bf16.mxu0 0
        %805 = vmatmul.mubr.bf16.gmra.mrb[0].mxu0 %v468
        %v806 = vpop.f32.mrb[0].mxu0
        %v807 = vadd.f32 0.0, %v806
        %v808 = vpop.f32.mrb[0].mxu0
        %v809 = vpop.f32.mrb[0].mxu0
        %v810 = vadd.f32 0.0, %v809
        %v811 = vpop.f32.mrb[0].mxu0
        %812 = vmatprep.mubr.bf16.mxu0 0
        %813 = vmatmul.mubr.bf16.gmra.mrb[0].mxu0 %v471
        %v814 = vpop.f32.mrb[0].mxu0
        %v815 = vadd.f32 0.0, %v814
        %v816 = vpop.f32.mrb[0].mxu0
        %v817 = vpop.f32.mrb[0].mxu0
        %v818 = vadd.f32 0.0, %v817
        %v819 = vpop.f32.mrb[0].mxu0
        %820 = vmatprep.mubr.bf16.mxu0 0
        %821 = vmatmul.mubr.bf16.gmra.mrb[0].mxu0 %v474
        %v822 = vpop.f32.mrb[0].mxu0
        %v823 = vadd.f32 0.0, %v822
        %v824 = vpop.f32.mrb[0].mxu0
        %v825 = vpop.f32.mrb[0].mxu0
        %v826 = vadd.f32 0.0, %v825
        %v827 = vpop.f32.mrb[0].mxu0
        %828 = vmatprep.mubr.bf16.mxu0 0
        %829 = vmatmul.mubr.bf16.gmra.mrb[0].mxu0 %v477
        %v830 = vpop.f32.mrb[0].mxu0
        %v831 = vadd.f32 0.0, %v830
        %v832 = vpop.f32.mrb[0].mxu0
        %v833 = vpop.f32.mrb[0].mxu0
        %v834 = vadd.f32 0.0, %v833
        %v835 = vpop.f32.mrb[0].mxu0
        %836 = vmatprep.mubr.bf16.mxu0 0
        %837 = vmatmul.mubr.bf16.gmra.mrb[0].mxu0 %v480
        %v838 = vpop.f32.mrb[0].mxu0
        %v839 = vadd.f32 0.0, %v838
        %v840 = vpop.f32.mrb[0].mxu0
        %v841 = vpop.f32.mrb[0].mxu0
        %v842 = vadd.f32 0.0, %v841
        %v843 = vpop.f32.mrb[0].mxu0
        %844 = vmatprep.mubr.bf16.mxu0 0
        %845 = vmatmul.mubr.bf16.gmra.mrb[0].mxu0 %v483
        %v846 = vpop.f32.mrb[0].mxu0
        %v847 = vadd.f32 0.0, %v846
        %v848 = vpop.f32.mrb[0].mxu0
        %v849 = vpop.f32.mrb[0].mxu0
        %v850 = vadd.f32 0.0, %v849
        %v851 = vpop.f32.mrb[0].mxu0
        %852 = vmatprep.mubr.bf16.mxu0 0
        %853 = vmatmul.mubr.bf16.gmra.mrb[0].mxu0 %v486
        %v854 = vpop.f32.mrb[0].mxu0
        %v855 = vadd.f32 0.0, %v854
        %v856 = vpop.f32.mrb[0].mxu0
        %v857 = vpop.f32.mrb[0].mxu0
        %v858 = vadd.f32 0.0, %v857
        %v859 = vpop.f32.mrb[0].mxu0
        %860 = vmatprep.mubr.bf16.mxu0 0
        %861 = vmatmul.mubr.bf16.gmra.mrb[0].mxu0 %v489
        %v862 = vpop.f32.mrb[0].mxu0
        %v863 = vadd.f32 0.0, %v862
        %v864 = vpop.f32.mrb[0].mxu0
        %v865 = vpop.f32.mrb[0].mxu0
        %v866 = vadd.f32 0.0, %v865
        %v867 = vpop.f32.mrb[0].mxu0
        %868 = vmatprep.mubr.bf16.mxu0 0
        %869 = vmatmul.mubr.bf16.gmra.mrb[0].mxu0 %v492
        %v870 = vpop.f32.mrb[0].mxu0
        %v871 = vadd.f32 0.0, %v870
        %v872 = vpop.f32.mrb[0].mxu0
        %v873 = vpop.f32.mrb[0].mxu0
        %v874 = vadd.f32 0.0, %v873
        %v875 = vpop.f32.mrb[0].mxu0
        %876 = vmatprep.mubr.bf16.mxu0 0
        %877 = vmatmul.mubr.bf16.gmra.mrb[0].mxu0 %v495
        %v878 = vpop.f32.mrb[0].mxu0
        %v879 = vadd.f32 0.0, %v878
        %v880 = vpop.f32.mrb[0].mxu0
        %v881 = vpop.f32.mrb[0].mxu0
        %v882 = vadd.f32 0.0, %v881
        %v883 = vpop.f32.mrb[0].mxu0
        %884 = vmatprep.mubr.bf16.mxu0 0
        %885 = vmatmul.mubr.bf16.gmra.mrb[0].mxu0 %v498
        %v886 = vpop.f32.mrb[0].mxu0
        %v887 = vadd.f32 0.0, %v886
        %v888 = vpop.f32.mrb[0].mxu0
        %v889 = vpop.f32.mrb[0].mxu0
        %v890 = vadd.f32 0.0, %v889
        %v891 = vpop.f32.mrb[0].mxu0
        %892 = vmatprep.mubr.bf16.mxu0 0
        %893 = vmatmul.mubr.bf16.gmra.mrb[0].mxu0 %v501
        %v894 = vpop.f32.mrb[0].mxu0
        %v895 = vadd.f32 0.0, %v894
        %v896 = vpop.f32.mrb[0].mxu0
        %v897 = vpop.f32.mrb[0].mxu0
        %v898 = vadd.f32 0.0, %v897
        %v899 = vpop.f32.mrb[0].mxu0
        %900 = vmatprep.mubr.bf16.mxu0 0
        %901 = vmatmul.mubr.bf16.gmra.mrb[0].mxu0 %v504
        %v902 = vpop.f32.mrb[0].mxu0
        %v903 = vadd.f32 0.0, %v902
        %v904 = vpop.f32.mrb[0].mxu0
        %v905 = vpop.f32.mrb[0].mxu0
        %v906 = vadd.f32 0.0, %v905
        %v907 = vpop.f32.mrb[0].mxu0
        %908 = vmatprep.mubr.bf16.mxu0 0
        %909 = vmatmul.mubr.bf16.gmra.mrb[0].mxu0 %v751
        %v910 = vpop.f32.mrb[0].mxu0
        %v911 = vadd.f32 0.0, %v910
        %v912 = vpop.f32.mrb[0].mxu0
        %v913 = vpop.f32.mrb[0].mxu0
        %v914 = vadd.f32 0.0, %v913
        %v915 = vpop.f32.mrb[0].mxu0
        %916 = vdwg.mxu0
        %v917 = vadd.f32 %v710, %v791
        %v918 = vadd.f32 %v711, %v794
        %v919 = vadd.f32 %v712, %v799
        %v920 = vadd.f32 %v713, %v802
        %v921 = vadd.f32 %v714, %v807
        %v922 = vadd.f32 %v715, %v810
        %v923 = vadd.f32 %v716, %v815
        %v924 = vadd.f32 %v717, %v818
        %v925 = vadd.f32 %v718, %v823
        %v926 = vadd.f32 %v719, %v826
        %v927 = vadd.f32 %v720, %v831
        %v928 = vadd.f32 %v721, %v834
        %v929 = vadd.f32 %v722, %v839
        %v930 = vadd.f32 %v723, %v842
        %v931 = vadd.f32 %v724, %v847
        %v932 = vadd.f32 %v725, %v850
        %v933 = vadd.f32 %v726, %v855
        %v934 = vadd.f32 %v727, %v858
        %v935 = vadd.f32 %v728, %v863
        %v936 = vadd.f32 %v729, %v866
        %v937 = vadd.f32 %v730, %v871
        %v938 = vadd.f32 %v731, %v874
        %v939 = vadd.f32 %v732, %v879
        %v940 = vadd.f32 %v733, %v882
        %v941 = vadd.f32 %v734, %v887
        %v942 = vadd.f32 %v735, %v890
        %v943 = vadd.f32 %v736, %v895
        %v944 = vadd.f32 %v737, %v898
        %v945 = vadd.f32 %v738, %v903
        %v946 = vadd.f32 %v739, %v906
        %v947 = vadd.f32 %v740, %v911
        %v948 = vadd.f32 %v741, %v914
        %949 = vst [vmem:[#allocation2] sm:$0xff] %v917
        %950 = vst [vmem:[#allocation2 + $0x8] sm:$0xff] %v918
        %951 = vst [vmem:[#allocation2 + $0x10] sm:$0xff] %v919
        %952 = vst [vmem:[#allocation2 + $0x18] sm:$0xff] %v920
        %953 = vst [vmem:[#allocation2 + $0x20] sm:$0xff] %v921
        %954 = vst [vmem:[#allocation2 + $0x28] sm:$0xff] %v922
        %955 = vst [vmem:[#allocation2 + $0x30] sm:$0xff] %v923
        %956 = vst [vmem:[#allocation2 + $0x38] sm:$0xff] %v924
        %957 = vst [vmem:[#allocation2 + $0x40] sm:$0xff] %v925
        %958 = vst [vmem:[#allocation2 + $0x48] sm:$0xff] %v926
        %959 = vst [vmem:[#allocation2 + $0x50] sm:$0xff] %v927
        %960 = vst [vmem:[#allocation2 + $0x58] sm:$0xff] %v928
        %961 = vst [vmem:[#allocation2 + $0x60] sm:$0xff] %v929
        %962 = vst [vmem:[#allocation2 + $0x68] sm:$0xff] %v930
        %963 = vst [vmem:[#allocation2 + $0x70] sm:$0xff] %v931
        %964 = vst [vmem:[#allocation2 + $0x78] sm:$0xff] %v932
        %965 = vst [vmem:[#allocation2 + $0x80] sm:$0xff] %v933
        %966 = vst [vmem:[#allocation2 + $0x88] sm:$0xff] %v934
        %967 = vst [vmem:[#allocation2 + $0x90] sm:$0xff] %v935
        %968 = vst [vmem:[#allocation2 + $0x98] sm:$0xff] %v936
        %969 = vst [vmem:[#allocation2 + $0xa0] sm:$0xff] %v937
        %970 = vst [vmem:[#allocation2 + $0xa8] sm:$0xff] %v938
        %971 = vst [vmem:[#allocation2 + $0xb0] sm:$0xff] %v939
        %972 = vst [vmem:[#allocation2 + $0xb8] sm:$0xff] %v940
        %973 = vst [vmem:[#allocation2 + $0xc0] sm:$0xff] %v941
        %974 = vst [vmem:[#allocation2 + $0xc8] sm:$0xff] %v942
        %975 = vst [vmem:[#allocation2 + $0xd0] sm:$0xff] %v943
        %976 = vst [vmem:[#allocation2 + $0xd8] sm:$0xff] %v944
        %977 = vst [vmem:[#allocation2 + $0xe0] sm:$0xff] %v945
        %978 = vst [vmem:[#allocation2 + $0xe8] sm:$0xff] %v946
        %979 = vst [vmem:[#allocation2 + $0xf0] sm:$0xff] %v947
        %980 = vst [vmem:[#allocation2 + $0xf8] sm:$0xff] %v948
        %v981 = vld [vmem:[%s325] sm:$0xf]
        %v982 = vld [vmem:[%s325 + $0x4] sm:$0xf]
        %v983 = vld [vmem:[%s325 + $0x8] sm:$0xf]
        %v984 = vld [vmem:[%s325 + $0xc] sm:$0xf]
        %v989 = vunpack.c.l.b16 %v981
        %v990 = vunpack.c.l.b16 %v982
        %v991 = vunpack.c.l.b16 %v983
        %v992 = vunpack.c.l.b16 %v984
        %v993 = vpack.c.b16 %v990, %v989
        %v994 = vpack.c.b16 %v992, %v991
        %v995 = vld [vmem:[#allocation2] sm:$0xff]
        %v996 = vld [vmem:[#allocation2 + $0x8] sm:$0xff]
        %v997 = vld [vmem:[#allocation2 + $0x10] sm:$0xff]
        %v998 = vld [vmem:[#allocation2 + $0x18] sm:$0xff]
        %v999 = vld [vmem:[#allocation2 + $0x20] sm:$0xff]
        %v1000 = vld [vmem:[#allocation2 + $0x28] sm:$0xff]
        %v1001 = vld [vmem:[#allocation2 + $0x30] sm:$0xff]
        %v1002 = vld [vmem:[#allocation2 + $0x38] sm:$0xff]
        %v1003 = vld [vmem:[#allocation2 + $0x40] sm:$0xff]
        %v1004 = vld [vmem:[#allocation2 + $0x48] sm:$0xff]
        %v1005 = vld [vmem:[#allocation2 + $0x50] sm:$0xff]
        %v1006 = vld [vmem:[#allocation2 + $0x58] sm:$0xff]
        %v1007 = vld [vmem:[#allocation2 + $0x60] sm:$0xff]
        %v1008 = vld [vmem:[#allocation2 + $0x68] sm:$0xff]
        %v1009 = vld [vmem:[#allocation2 + $0x70] sm:$0xff]
        %v1010 = vld [vmem:[#allocation2 + $0x78] sm:$0xff]
        %v1011 = vld [vmem:[#allocation2 + $0x80] sm:$0xff]
        %v1012 = vld [vmem:[#allocation2 + $0x88] sm:$0xff]
        %v1013 = vld [vmem:[#allocation2 + $0x90] sm:$0xff]
        %v1014 = vld [vmem:[#allocation2 + $0x98] sm:$0xff]
        %v1015 = vld [vmem:[#allocation2 + $0xa0] sm:$0xff]
        %v1016 = vld [vmem:[#allocation2 + $0xa8] sm:$0xff]
        %v1017 = vld [vmem:[#allocation2 + $0xb0] sm:$0xff]
        %v1018 = vld [vmem:[#allocation2 + $0xb8] sm:$0xff]
        %v1019 = vld [vmem:[#allocation2 + $0xc0] sm:$0xff]
        %v1020 = vld [vmem:[#allocation2 + $0xc8] sm:$0xff]
        %v1021 = vld [vmem:[#allocation2 + $0xd0] sm:$0xff]
        %v1022 = vld [vmem:[#allocation2 + $0xd8] sm:$0xff]
        %v1023 = vld [vmem:[#allocation2 + $0xe0] sm:$0xff]
        %v1024 = vld [vmem:[#allocation2 + $0xe8] sm:$0xff]
        %v1025 = vld [vmem:[#allocation2 + $0xf0] sm:$0xff]
        %v1026 = vld [vmem:[#allocation2 + $0xf8] sm:$0xff]
        %s1027 = scalar_lea.vmem %s332, 16
        %v1028 = vld [vmem:[%s1027] sm:$0xf]
        %v1029 = vld [vmem:[%s1027 + $0x4] sm:$0x3]
        %v1032 = vunpack.c.l.b16 %v1028
        %v1033 = vunpack.c.l.b16 %v1029
        %v1034 = vpack.c.b16 %v1033, %v1032
        %v1036 = vsel %vm457, %v993, 0
        %v1039 = vsel %vm457, %v994, 0
        %v1042 = vsel %vm506, %v1034, 0
        %1044 = vmatprep.subr.bf16.mxu0 0
        %1045 = vmatpush1.bf16.msra.mxu0 %v1042
        %1046 = vmatprep.subr.bf16.mxu0 0
        %1047 = vmatpush1.bf16.msra.mxu0 0
        %1048 = vmatprep.subr.bf16.mxu0 0
        %1049 = vmatpush1.bf16.msra.mxu0 0
        %1050 = vmatprep.subr.bf16.mxu0 0
        %1051 = vmatpush1.bf16.msra.mxu0 0
        %1052 = vmatprep.subr.bf16.mxu0 0
        %1053 = vmatpush1.bf16.msra.mxu0 0
        %1054 = vmatprep.subr.bf16.mxu0 0
        %1055 = vmatpush1.bf16.msra.mxu0 0
        %1056 = vmatprep.subr.bf16.mxu0 0
        %1057 = vmatpush1.bf16.msra.mxu0 0
        %1058 = vmatprep.subr.bf16.mxu0 0
        %1059 = vmatpush1.bf16.msra.mxu0 0
        %1060 = vmatprep.subr.bf16.mxu0 0
        %1061 = vmatpush1.bf16.msra.mxu0 0
        %1062 = vmatprep.subr.bf16.mxu0 0
        %1063 = vmatpush1.bf16.msra.mxu0 0
        %1064 = vmatprep.subr.bf16.mxu0 0
        %1065 = vmatpush1.bf16.msra.mxu0 0
        %1066 = vmatprep.subr.bf16.mxu0 0
        %1067 = vmatpush1.bf16.msra.mxu0 0
        %1068 = vmatprep.subr.bf16.mxu0 0
        %1069 = vmatpush1.bf16.msra.mxu0 0
        %1070 = vmatprep.subr.bf16.mxu0 0
        %1071 = vmatpush1.bf16.msra.mxu0 0
        %1072 = vmatprep.subr.bf16.mxu0 0
        %1073 = vmatpush1.bf16.msra.mxu0 0
        %1074 = vmatprep.subr.bf16.mxu0 0
        %1075 = vmatpush1.bf16.msra.mxu0 0
        %1076 = vmatprep.mubr.bf16.mxu0 0
        %1077 = vmatmul.mubr.bf16.gmra.mrb[0].mxu0 %v465
        %v1078 = vpop.f32.mrb[0].mxu0
        %v1079 = vadd.f32 0.0, %v1078
        %v1080 = vpop.f32.mrb[0].mxu0
        %v1081 = vpop.f32.mrb[0].mxu0
        %v1082 = vadd.f32 0.0, %v1081
        %v1083 = vpop.f32.mrb[0].mxu0
        %1084 = vmatprep.mubr.bf16.mxu0 0
        %1085 = vmatmul.mubr.bf16.gmra.mrb[0].mxu0 %v468
        %v1086 = vpop.f32.mrb[0].mxu0
        %v1087 = vadd.f32 0.0, %v1086
        %v1088 = vpop.f32.mrb[0].mxu0
        %v1089 = vpop.f32.mrb[0].mxu0
        %v1090 = vadd.f32 0.0, %v1089
        %v1091 = vpop.f32.mrb[0].mxu0
        %1092 = vmatprep.mubr.bf16.mxu0 0
        %1093 = vmatmul.mubr.bf16.gmra.mrb[0].mxu0 %v471
        %v1094 = vpop.f32.mrb[0].mxu0
        %v1095 = vadd.f32 0.0, %v1094
        %v1096 = vpop.f32.mrb[0].mxu0
        %v1097 = vpop.f32.mrb[0].mxu0
        %v1098 = vadd.f32 0.0, %v1097
        %v1099 = vpop.f32.mrb[0].mxu0
        %1100 = vmatprep.mubr.bf16.mxu0 0
        %1101 = vmatmul.mubr.bf16.gmra.mrb[0].mxu0 %v474
        %v1102 = vpop.f32.mrb[0].mxu0
        %v1103 = vadd.f32 0.0, %v1102
        %v1104 = vpop.f32.mrb[0].mxu0
        %v1105 = vpop.f32.mrb[0].mxu0
        %v1106 = vadd.f32 0.0, %v1105
        %v1107 = vpop.f32.mrb[0].mxu0
        %1108 = vmatprep.mubr.bf16.mxu0 0
        %1109 = vmatmul.mubr.bf16.gmra.mrb[0].mxu0 %v477
        %v1110 = vpop.f32.mrb[0].mxu0
        %v1111 = vadd.f32 0.0, %v1110
        %v1112 = vpop.f32.mrb[0].mxu0
        %v1113 = vpop.f32.mrb[0].mxu0
        %v1114 = vadd.f32 0.0, %v1113
        %v1115 = vpop.f32.mrb[0].mxu0
        %1116 = vmatprep.mubr.bf16.mxu0 0
        %1117 = vmatmul.mubr.bf16.gmra.mrb[0].mxu0 %v480
        %v1118 = vpop.f32.mrb[0].mxu0
        %v1119 = vadd.f32 0.0, %v1118
        %v1120 = vpop.f32.mrb[0].mxu0
        %v1121 = vpop.f32.mrb[0].mxu0
        %v1122 = vadd.f32 0.0, %v1121
        %v1123 = vpop.f32.mrb[0].mxu0
        %1124 = vmatprep.mubr.bf16.mxu0 0
        %1125 = vmatmul.mubr.bf16.gmra.mrb[0].mxu0 %v483
        %v1126 = vpop.f32.mrb[0].mxu0
        %v1127 = vadd.f32 0.0, %v1126
        %v1128 = vpop.f32.mrb[0].mxu0
        %v1129 = vpop.f32.mrb[0].mxu0
        %v1130 = vadd.f32 0.0, %v1129
        %v1131 = vpop.f32.mrb[0].mxu0
        %1132 = vmatprep.mubr.bf16.mxu0 0
        %1133 = vmatmul.mubr.bf16.gmra.mrb[0].mxu0 %v486
        %v1134 = vpop.f32.mrb[0].mxu0
        %v1135 = vadd.f32 0.0, %v1134
        %v1136 = vpop.f32.mrb[0].mxu0
        %v1137 = vpop.f32.mrb[0].mxu0
        %v1138 = vadd.f32 0.0, %v1137
        %v1139 = vpop.f32.mrb[0].mxu0
        %1140 = vmatprep.mubr.bf16.mxu0 0
        %1141 = vmatmul.mubr.bf16.gmra.mrb[0].mxu0 %v489
        %v1142 = vpop.f32.mrb[0].mxu0
        %v1143 = vadd.f32 0.0, %v1142
        %v1144 = vpop.f32.mrb[0].mxu0
        %v1145 = vpop.f32.mrb[0].mxu0
        %v1146 = vadd.f32 0.0, %v1145
        %v1147 = vpop.f32.mrb[0].mxu0
        %1148 = vmatprep.mubr.bf16.mxu0 0
        %1149 = vmatmul.mubr.bf16.gmra.mrb[0].mxu0 %v492
        %v1150 = vpop.f32.mrb[0].mxu0
        %v1151 = vadd.f32 0.0, %v1150
        %v1152 = vpop.f32.mrb[0].mxu0
        %v1153 = vpop.f32.mrb[0].mxu0
        %v1154 = vadd.f32 0.0, %v1153
        %v1155 = vpop.f32.mrb[0].mxu0
        %1156 = vmatprep.mubr.bf16.mxu0 0
        %1157 = vmatmul.mubr.bf16.gmra.mrb[0].mxu0 %v495
        %v1158 = vpop.f32.mrb[0].mxu0
        %v1159 = vadd.f32 0.0, %v1158
        %v1160 = vpop.f32.mrb[0].mxu0
        %v1161 = vpop.f32.mrb[0].mxu0
        %v1162 = vadd.f32 0.0, %v1161
        %v1163 = vpop.f32.mrb[0].mxu0
        %1164 = vmatprep.mubr.bf16.mxu0 0
        %1165 = vmatmul.mubr.bf16.gmra.mrb[0].mxu0 %v498
        %v1166 = vpop.f32.mrb[0].mxu0
        %v1167 = vadd.f32 0.0, %v1166
        %v1168 = vpop.f32.mrb[0].mxu0
        %v1169 = vpop.f32.mrb[0].mxu0
        %v1170 = vadd.f32 0.0, %v1169
        %v1171 = vpop.f32.mrb[0].mxu0
        %1172 = vmatprep.mubr.bf16.mxu0 0
        %1173 = vmatmul.mubr.bf16.gmra.mrb[0].mxu0 %v501
        %v1174 = vpop.f32.mrb[0].mxu0
        %v1175 = vadd.f32 0.0, %v1174
        %v1176 = vpop.f32.mrb[0].mxu0
        %v1177 = vpop.f32.mrb[0].mxu0
        %v1178 = vadd.f32 0.0, %v1177
        %v1179 = vpop.f32.mrb[0].mxu0
        %1180 = vmatprep.mubr.bf16.mxu0 0
        %1181 = vmatmul.mubr.bf16.gmra.mrb[0].mxu0 %v504
        %v1182 = vpop.f32.mrb[0].mxu0
        %v1183 = vadd.f32 0.0, %v1182
        %v1184 = vpop.f32.mrb[0].mxu0
        %v1185 = vpop.f32.mrb[0].mxu0
        %v1186 = vadd.f32 0.0, %v1185
        %v1187 = vpop.f32.mrb[0].mxu0
        %1188 = vmatprep.mubr.bf16.mxu0 0
        %1189 = vmatmul.mubr.bf16.gmra.mrb[0].mxu0 %v1036
        %v1190 = vpop.f32.mrb[0].mxu0
        %v1191 = vadd.f32 0.0, %v1190
        %v1192 = vpop.f32.mrb[0].mxu0
        %v1193 = vpop.f32.mrb[0].mxu0
        %v1194 = vadd.f32 0.0, %v1193
        %v1195 = vpop.f32.mrb[0].mxu0
        %1196 = vmatprep.mubr.bf16.mxu0 0
        %1197 = vmatmul.mubr.bf16.gmra.mrb[0].mxu0 %v1039
        %v1198 = vpop.f32.mrb[0].mxu0
        %v1199 = vadd.f32 0.0, %v1198
        %v1200 = vpop.f32.mrb[0].mxu0
        %v1201 = vpop.f32.mrb[0].mxu0
        %v1202 = vadd.f32 0.0, %v1201
        %v1203 = vpop.f32.mrb[0].mxu0
        %1204 = vdwg.mxu0
        %v1205 = vadd.f32 %v995, %v1079
        %v1206 = vadd.f32 %v996, %v1082
        %v1207 = vadd.f32 %v997, %v1087
        %v1208 = vadd.f32 %v998, %v1090
        %v1209 = vadd.f32 %v999, %v1095
        %v1210 = vadd.f32 %v1000, %v1098
        %v1211 = vadd.f32 %v1001, %v1103
        %v1212 = vadd.f32 %v1002, %v1106
        %v1213 = vadd.f32 %v1003, %v1111
        %v1214 = vadd.f32 %v1004, %v1114
        %v1215 = vadd.f32 %v1005, %v1119
        %v1216 = vadd.f32 %v1006, %v1122
        %v1217 = vadd.f32 %v1007, %v1127
        %v1218 = vadd.f32 %v1008, %v1130
        %v1219 = vadd.f32 %v1009, %v1135
        %v1220 = vadd.f32 %v1010, %v1138
        %v1221 = vadd.f32 %v1011, %v1143
        %v1222 = vadd.f32 %v1012, %v1146
        %v1223 = vadd.f32 %v1013, %v1151
        %v1224 = vadd.f32 %v1014, %v1154
        %v1225 = vadd.f32 %v1015, %v1159
        %v1226 = vadd.f32 %v1016, %v1162
        %v1227 = vadd.f32 %v1017, %v1167
        %v1228 = vadd.f32 %v1018, %v1170
        %v1229 = vadd.f32 %v1019, %v1175
        %v1230 = vadd.f32 %v1020, %v1178
        %v1231 = vadd.f32 %v1021, %v1183
        %v1232 = vadd.f32 %v1022, %v1186
        %v1233 = vadd.f32 %v1023, %v1191
        %v1234 = vadd.f32 %v1024, %v1194
        %v1235 = vadd.f32 %v1025, %v1199
        %v1236 = vadd.f32 %v1026, %v1202
        %1237 = vst [vmem:[#allocation2] sm:$0xff] %v1205
        %1238 = vst [vmem:[#allocation2 + $0x8] sm:$0xff] %v1206
        %1239 = vst [vmem:[#allocation2 + $0x10] sm:$0xff] %v1207
        %1240 = vst [vmem:[#allocation2 + $0x18] sm:$0xff] %v1208
        %1241 = vst [vmem:[#allocation2 + $0x20] sm:$0xff] %v1209
        %1242 = vst [vmem:[#allocation2 + $0x28] sm:$0xff] %v1210
        %1243 = vst [vmem:[#allocation2 + $0x30] sm:$0xff] %v1211
        %1244 = vst [vmem:[#allocation2 + $0x38] sm:$0xff] %v1212
        %1245 = vst [vmem:[#allocation2 + $0x40] sm:$0xff] %v1213
        %1246 = vst [vmem:[#allocation2 + $0x48] sm:$0xff] %v1214
        %1247 = vst [vmem:[#allocation2 + $0x50] sm:$0xff] %v1215
        %1248 = vst [vmem:[#allocation2 + $0x58] sm:$0xff] %v1216
        %1249 = vst [vmem:[#allocation2 + $0x60] sm:$0xff] %v1217
        %1250 = vst [vmem:[#allocation2 + $0x68] sm:$0xff] %v1218
        %1251 = vst [vmem:[#allocation2 + $0x70] sm:$0xff] %v1219
        %1252 = vst [vmem:[#allocation2 + $0x78] sm:$0xff] %v1220
        %1253 = vst [vmem:[#allocation2 + $0x80] sm:$0xff] %v1221
        %1254 = vst [vmem:[#allocation2 + $0x88] sm:$0xff] %v1222
        %1255 = vst [vmem:[#allocation2 + $0x90] sm:$0xff] %v1223
        %1256 = vst [vmem:[#allocation2 + $0x98] sm:$0xff] %v1224
        %1257 = vst [vmem:[#allocation2 + $0xa0] sm:$0xff] %v1225
        %1258 = vst [vmem:[#allocation2 + $0xa8] sm:$0xff] %v1226
        %1259 = vst [vmem:[#allocation2 + $0xb0] sm:$0xff] %v1227
        %1260 = vst [vmem:[#allocation2 + $0xb8] sm:$0xff] %v1228
        %1261 = vst [vmem:[#allocation2 + $0xc0] sm:$0xff] %v1229
        %1262 = vst [vmem:[#allocation2 + $0xc8] sm:$0xff] %v1230
        %1263 = vst [vmem:[#allocation2 + $0xd0] sm:$0xff] %v1231
        %1264 = vst [vmem:[#allocation2 + $0xd8] sm:$0xff] %v1232
        %1265 = vst [vmem:[#allocation2 + $0xe0] sm:$0xff] %v1233
        %1266 = vst [vmem:[#allocation2 + $0xe8] sm:$0xff] %v1234
        %1267 = vst [vmem:[#allocation2 + $0xf0] sm:$0xff] %v1235
        %1268 = vst [vmem:[#allocation2 + $0xf8] sm:$0xff] %v1236
        %v1269 = vld [vmem:[#allocation2] sm:$0xff]
        %v1270 = vld [vmem:[#allocation2 + $0x8] sm:$0xff]
        %v1271 = vld [vmem:[#allocation2 + $0x10] sm:$0xff]
        %v1272 = vld [vmem:[#allocation2 + $0x18] sm:$0xff]
        %v1273 = vld [vmem:[#allocation2 + $0x20] sm:$0xff]
        %v1274 = vld [vmem:[#allocation2 + $0x28] sm:$0xff]
        %v1275 = vld [vmem:[#allocation2 + $0x30] sm:$0xff]
        %v1276 = vld [vmem:[#allocation2 + $0x38] sm:$0xff]
        %v1277 = vld [vmem:[#allocation2 + $0x40] sm:$0xff]
        %v1278 = vld [vmem:[#allocation2 + $0x48] sm:$0xff]
        %v1279 = vld [vmem:[#allocation2 + $0x50] sm:$0xff]
        %v1280 = vld [vmem:[#allocation2 + $0x58] sm:$0xff]
        %v1281 = vld [vmem:[#allocation2 + $0x60] sm:$0xff]
        %v1282 = vld [vmem:[#allocation2 + $0x68] sm:$0xff]
        %v1283 = vld [vmem:[#allocation2 + $0x70] sm:$0xff]
        %v1284 = vld [vmem:[#allocation2 + $0x78] sm:$0xff]
        %v1285 = vld [vmem:[#allocation2 + $0x80] sm:$0xff]
        %v1286 = vld [vmem:[#allocation2 + $0x88] sm:$0xff]
        %v1287 = vld [vmem:[#allocation2 + $0x90] sm:$0xff]
        %v1288 = vld [vmem:[#allocation2 + $0x98] sm:$0xff]
        %v1289 = vld [vmem:[#allocation2 + $0xa0] sm:$0xff]
        %v1290 = vld [vmem:[#allocation2 + $0xa8] sm:$0xff]
        %v1291 = vld [vmem:[#allocation2 + $0xb0] sm:$0xff]
        %v1292 = vld [vmem:[#allocation2 + $0xb8] sm:$0xff]
        %v1293 = vld [vmem:[#allocation2 + $0xc0] sm:$0xff]
        %v1294 = vld [vmem:[#allocation2 + $0xc8] sm:$0xff]
        %v1295 = vld [vmem:[#allocation2 + $0xd0] sm:$0xff]
        %v1296 = vld [vmem:[#allocation2 + $0xd8] sm:$0xff]
        %v1297 = vld [vmem:[#allocation2 + $0xe0] sm:$0xff]
        %v1298 = vld [vmem:[#allocation2 + $0xe8] sm:$0xff]
        %v1299 = vld [vmem:[#allocation2 + $0xf0] sm:$0xff]
        %v1300 = vld [vmem:[#allocation2 + $0xf8] sm:$0xff]
        %v1301 = vld [vmem:[%s335] sm:$0x1]
        %v1303 = vlaneseq
        %v1304 = vshrl.u32 %v1303, 7
        %v1305 = vsub.s32 0, %v1304
        %v1306 = vrot.slane %v1301, %v1305
        %v1308 = vadd.f32 %v1269, %v1306
        %v1309 = vadd.f32 %v1270, %v1306
        %v1310 = vadd.f32 %v1271, %v1306
        %v1311 = vadd.f32 %v1272, %v1306
        %v1312 = vadd.f32 %v1273, %v1306
        %v1313 = vadd.f32 %v1274, %v1306
        %v1314 = vadd.f32 %v1275, %v1306
        %v1315 = vadd.f32 %v1276, %v1306
        %v1316 = vadd.f32 %v1277, %v1306
        %v1317 = vadd.f32 %v1278, %v1306
        %v1318 = vadd.f32 %v1279, %v1306
        %v1319 = vadd.f32 %v1280, %v1306
        %v1320 = vadd.f32 %v1281, %v1306
        %v1321 = vadd.f32 %v1282, %v1306
        %v1322 = vadd.f32 %v1283, %v1306
        %v1323 = vadd.f32 %v1284, %v1306
        %v1324 = vadd.f32 %v1285, %v1306
        %v1325 = vadd.f32 %v1286, %v1306
        %v1326 = vadd.f32 %v1287, %v1306
        %v1327 = vadd.f32 %v1288, %v1306
        %v1328 = vadd.f32 %v1289, %v1306
        %v1329 = vadd.f32 %v1290, %v1306
        %v1330 = vadd.f32 %v1291, %v1306
        %v1331 = vadd.f32 %v1292, %v1306
        %v1332 = vadd.f32 %v1293, %v1306
        %v1333 = vadd.f32 %v1294, %v1306
        %v1334 = vadd.f32 %v1295, %v1306
        %v1335 = vadd.f32 %v1296, %v1306
        %v1336 = vadd.f32 %v1297, %v1306
        %v1337 = vadd.f32 %v1298, %v1306
        %v1338 = vadd.f32 %v1299, %v1306
        %v1339 = vadd.f32 %v1300, %v1306
        %vm1340 = vcmp.gt.f32.partialorder %v1308, 0.0
        %vm1341 = vcmp.gt.f32.partialorder %v1309, 0.0
        %vm1342 = vcmp.gt.f32.partialorder %v1310, 0.0
        %vm1343 = vcmp.gt.f32.partialorder %v1311, 0.0
        %vm1344 = vcmp.gt.f32.partialorder %v1312, 0.0
        %vm1345 = vcmp.gt.f32.partialorder %v1313, 0.0
        %vm1346 = vcmp.gt.f32.partialorder %v1314, 0.0
        %vm1347 = vcmp.gt.f32.partialorder %v1315, 0.0
        %vm1348 = vcmp.gt.f32.partialorder %v1316, 0.0
        %vm1349 = vcmp.gt.f32.partialorder %v1317, 0.0
        %vm1350 = vcmp.gt.f32.partialorder %v1318, 0.0
        %vm1351 = vcmp.gt.f32.partialorder %v1319, 0.0
        %vm1352 = vcmp.gt.f32.partialorder %v1320, 0.0
        %vm1353 = vcmp.gt.f32.partialorder %v1321, 0.0
        %vm1354 = vcmp.gt.f32.partialorder %v1322, 0.0
        %vm1355 = vcmp.gt.f32.partialorder %v1323, 0.0
        %vm1356 = vcmp.gt.f32.partialorder %v1324, 0.0
        %vm1357 = vcmp.gt.f32.partialorder %v1325, 0.0
        %vm1358 = vcmp.gt.f32.partialorder %v1326, 0.0
        %vm1359 = vcmp.gt.f32.partialorder %v1327, 0.0
        %vm1360 = vcmp.gt.f32.partialorder %v1328, 0.0
        %vm1361 = vcmp.gt.f32.partialorder %v1329, 0.0
        %vm1362 = vcmp.gt.f32.partialorder %v1330, 0.0
        %vm1363 = vcmp.gt.f32.partialorder %v1331, 0.0
        %vm1364 = vcmp.gt.f32.partialorder %v1332, 0.0
        %vm1365 = vcmp.gt.f32.partialorder %v1333, 0.0
        %vm1366 = vcmp.gt.f32.partialorder %v1334, 0.0
        %vm1367 = vcmp.gt.f32.partialorder %v1335, 0.0
        %vm1368 = vcmp.gt.f32.partialorder %v1336, 0.0
        %vm1369 = vcmp.gt.f32.partialorder %v1337, 0.0
        %vm1370 = vcmp.gt.f32.partialorder %v1338, 0.0
        %vm1371 = vcmp.gt.f32.partialorder %v1339, 0.0
        %v1372 = vmul.f32 %v1308, 0.1
        %v1373 = vmul.f32 %v1309, 0.1
        %v1374 = vmul.f32 %v1310, 0.1
        %v1375 = vmul.f32 %v1311, 0.1
        %v1376 = vmul.f32 %v1312, 0.1
        %v1377 = vmul.f32 %v1313, 0.1
        %v1378 = vmul.f32 %v1314, 0.1
        %v1379 = vmul.f32 %v1315, 0.1
        %v1380 = vmul.f32 %v1316, 0.1
        %v1381 = vmul.f32 %v1317, 0.1
        %v1382 = vmul.f32 %v1318, 0.1
        %v1383 = vmul.f32 %v1319, 0.1
        %v1384 = vmul.f32 %v1320, 0.1
        %v1385 = vmul.f32 %v1321, 0.1
        %v1386 = vmul.f32 %v1322, 0.1
        %v1387 = vmul.f32 %v1323, 0.1
        %v1388 = vmul.f32 %v1324, 0.1
        %v1389 = vmul.f32 %v1325, 0.1
        %v1390 = vmul.f32 %v1326, 0.1
        %v1391 = vmul.f32 %v1327, 0.1
        %v1392 = vmul.f32 %v1328, 0.1
        %v1393 = vmul.f32 %v1329, 0.1
        %v1394 = vmul.f32 %v1330, 0.1
        %v1395 = vmul.f32 %v1331, 0.1
        %v1396 = vmul.f32 %v1332, 0.1
        %v1397 = vmul.f32 %v1333, 0.1
        %v1398 = vmul.f32 %v1334, 0.1
        %v1399 = vmul.f32 %v1335, 0.1
        %v1400 = vmul.f32 %v1336, 0.1
        %v1401 = vmul.f32 %v1337, 0.1
        %v1402 = vmul.f32 %v1338, 0.1
        %v1403 = vmul.f32 %v1339, 0.1
        %v1404 = vsel %vm1340, %v1308, %v1372
        %v1405 = vsel %vm1341, %v1309, %v1373
        %v1406 = vsel %vm1342, %v1310, %v1374
        %v1407 = vsel %vm1343, %v1311, %v1375
        %v1408 = vsel %vm1344, %v1312, %v1376
        %v1409 = vsel %vm1345, %v1313, %v1377
        %v1410 = vsel %vm1346, %v1314, %v1378
        %v1411 = vsel %vm1347, %v1315, %v1379
        %v1412 = vsel %vm1348, %v1316, %v1380
        %v1413 = vsel %vm1349, %v1317, %v1381
        %v1414 = vsel %vm1350, %v1318, %v1382
        %v1415 = vsel %vm1351, %v1319, %v1383
        %v1416 = vsel %vm1352, %v1320, %v1384
        %v1417 = vsel %vm1353, %v1321, %v1385
        %v1418 = vsel %vm1354, %v1322, %v1386
        %v1419 = vsel %vm1355, %v1323, %v1387
        %v1420 = vsel %vm1356, %v1324, %v1388
        %v1421 = vsel %vm1357, %v1325, %v1389
        %v1422 = vsel %vm1358, %v1326, %v1390
        %v1423 = vsel %vm1359, %v1327, %v1391
        %v1424 = vsel %vm1360, %v1328, %v1392
        %v1425 = vsel %vm1361, %v1329, %v1393
        %v1426 = vsel %vm1362, %v1330, %v1394
        %v1427 = vsel %vm1363, %v1331, %v1395
        %v1428 = vsel %vm1364, %v1332, %v1396
        %v1429 = vsel %vm1365, %v1333, %v1397
        %v1430 = vsel %vm1366, %v1334, %v1398
        %v1431 = vsel %vm1367, %v1335, %v1399
        %v1432 = vsel %vm1368, %v1336, %v1400
        %v1433 = vsel %vm1369, %v1337, %v1401
        %v1434 = vsel %vm1370, %v1338, %v1402
        %v1435 = vsel %vm1371, %v1339, %v1403
        %1436 = vst [vmem:[%s296] sm:$0xff] %v1404
        %1437 = vst [vmem:[%s296 + $0x8] sm:$0xff] %v1405
        %1438 = vst [vmem:[%s296 + $0x10] sm:$0xff] %v1406
        %1439 = vst [vmem:[%s296 + $0x18] sm:$0xff] %v1407
        %1440 = vst [vmem:[%s296 + $0x20] sm:$0xff] %v1408
        %1441 = vst [vmem:[%s296 + $0x28] sm:$0xff] %v1409
        %1442 = vst [vmem:[%s296 + $0x30] sm:$0xff] %v1410
        %1443 = vst [vmem:[%s296 + $0x38] sm:$0xff] %v1411
        %1444 = vst [vmem:[%s296 + $0x40] sm:$0xff] %v1412
        %1445 = vst [vmem:[%s296 + $0x48] sm:$0xff] %v1413
        %1446 = vst [vmem:[%s296 + $0x50] sm:$0xff] %v1414
        %1447 = vst [vmem:[%s296 + $0x58] sm:$0xff] %v1415
        %1448 = vst [vmem:[%s296 + $0x60] sm:$0xff] %v1416
        %1449 = vst [vmem:[%s296 + $0x68] sm:$0xff] %v1417
        %1450 = vst [vmem:[%s296 + $0x70] sm:$0xff] %v1418
        %1451 = vst [vmem:[%s296 + $0x78] sm:$0xff] %v1419
        %1452 = vst [vmem:[%s296 + $0x80] sm:$0xff] %v1420
        %1453 = vst [vmem:[%s296 + $0x88] sm:$0xff] %v1421
        %1454 = vst [vmem:[%s296 + $0x90] sm:$0xff] %v1422
        %1455 = vst [vmem:[%s296 + $0x98] sm:$0xff] %v1423
        %1456 = vst [vmem:[%s296 + $0xa0] sm:$0xff] %v1424
        %1457 = vst [vmem:[%s296 + $0xa8] sm:$0xff] %v1425
        %1458 = vst [vmem:[%s296 + $0xb0] sm:$0xff] %v1426
        %1459 = vst [vmem:[%s296 + $0xb8] sm:$0xff] %v1427
        %1460 = vst [vmem:[%s296 + $0xc0] sm:$0xff] %v1428
        %1461 = vst [vmem:[%s296 + $0xc8] sm:$0xff] %v1429
        %1462 = vst [vmem:[%s296 + $0xd0] sm:$0xff] %v1430
        %1463 = vst [vmem:[%s296 + $0xd8] sm:$0xff] %v1431
        %1464 = vst [vmem:[%s296 + $0xe0] sm:$0xff] %v1432
        %1465 = vst [vmem:[%s296 + $0xe8] sm:$0xff] %v1433
        %1466 = vst [vmem:[%s296 + $0xf0] sm:$0xff] %v1434
        %1467 = vst [vmem:[%s296 + $0xf8] sm:$0xff] %v1435
        %s1468 = sand.u32 %s161, 1
        %s1469 = scalar_lea.sflag [#allocation4], %s1468
        %s1470 = sand.u32 %s161, 1
        %s1471 = smul.addr %s1470, 256
        %s1472 = scalar_lea.vmem [#allocation3], %s1471
        // Predicated region
        $region37: #{tpu_custom_call.1} parent=35 // pred_check
          %p1473 = pneg %p171
        $region38: #{tpu_custom_call.1} parent=35 // pred_check_branch
          %1475 = sbr.rel (%p1473) target = $region40
        $region39: #{tpu_custom_call.1} parent=35 // pred_region
          %s1476 = smul.u32 32, %s25
          %s1478 = ssub.s32 4096, 4096
          %1479 = vsyncadd %s1469, %s1478
          %s1480 = sadd.s32 %s24, %s1476
          %s1481 = smul.addr %s23, 32
          %s1482 = sadd.s32 %s1480, %s1481
          %s1483 = smul.addr %s1482, 128
          %s1484 = scalar_lea.hbm %s4, %s1483
          %s1485 = sshll.u32 %s1472, 4
          %s1486 = int_to_ptr.vmem [resolvable:$true] %s1485
          %1491 = dma.vmem_to_hbm [thread:$0]  %s1486, 4096, %s1484, %s1469, 128, 128, 8
        $region40: #{tpu_custom_call.1} parent=35 // pred_fallthru
          _
      $region36: #{tpu_custom_call.1} parent=5 // pred_fallthru
        _
      %p1492 = scmp.le.s32.totalorder 2, %s13
      // Predicated region
      $region41: #{tpu_custom_call.1} parent=5 // pred_check
        %p1493 = pneg %p1492
      $region42: #{tpu_custom_call.1} parent=5 // pred_check_branch
        %1495 = sbr.rel (%p1493) target = $region44
      $region43: #{tpu_custom_call.1} parent=5 // pred_region
        %s1496 = ssub.s32 %s13, 2
        // Predicated region
        $region45: #{tpu_custom_call.1} parent=43 // pred_check
          %p1497 = pneg %p177
        $region46: #{tpu_custom_call.1} parent=43 // pred_check_branch
          %1499 = sbr.rel (%p1497) target = $region48
        $region47: #{tpu_custom_call.1} parent=43 // pred_region
          %s1500 = sand.u32 %s162, 1
          %s1501 = scalar_lea.sflag [#allocation4], %s1500
          %s1502 = sand.u32 %s162, 1
          %s1503 = smul.addr %s1502, 256
          %s1504 = scalar_lea.vmem [#allocation3], %s1503
          %1505 = dma.done %s1501, 4096
        $region48: #{tpu_custom_call.1} parent=43 // pred_fallthru
          _
      $region44: #{tpu_custom_call.1} parent=5 // pred_fallthru
        _
    $region6: #{tpu_custom_call.1} parent=1 // loop_footer
      %s17 = sadd.s32 1, %s13
    $region7: #{tpu_custom_call.1} parent=1 // loop_footer_branch
      %12 = sbr.rel target = $region3
    $region8: #{tpu_custom_call.1} parent=1 // loop_exit
      _
    %1506 = vsyncpa [#allocation4], 1
    %s1507 = scalar_lea.sflag [#allocation4], 1
    %1508 = vsyncpa %s1507, 1

</llo_original>
